<compile_context>
chip_gen: v7x
topology: tpu7x:2x2x1
jax: 0.10.0
libtpu: 0.0.40
codegen_flags: <defaults>
</compile_context>

<pallas_src>
import functools

import jax
import jax.numpy as jnp
import numpy as np
from jax.experimental import pallas as pl
from jax.experimental.pallas import tpu as pltpu

# MXU operand dtype. Kept f32 so the 1e-4 correctness check against the f32 reference holds.
# For production v6e/v7x use jnp.bfloat16 (accumulation stays f32; gating math stays f32).
_MM_DTYPE = jnp.float32


def _mm(a, w):
    """MXU matmul with f32 accumulation; `w` is already in _MM_DTYPE (pre-cast in the wrapper)."""
    return jnp.dot(a.astype(w.dtype), w, preferred_element_type=jnp.float32)


def _round_up(n, m):
    return ((n + m - 1) // m) * m


def _reorder_gates(w, H):
    """PyTorch LSTM gate order [i, f, g, o] -> [i, f, o, g] (contiguous sigmoid block)."""
    return jnp.concatenate([w[:H], w[H:2 * H], w[3 * H:4 * H], w[2 * H:3 * H]], axis=0)


# --------------------------------------------------------------------------------------
# Fused kernel: 2-layer LSTM recurrence (chunked over time) + pad mask + batched head epilogue.
# --------------------------------------------------------------------------------------
def _fused_encoder_kernel(
    pg0_ref,    # (TC, B, 4H)  layer-0 pre-gates (x @ Wih0.T + b0), gate order [i,f,o,g]
    len_ref,    # (B, 1) int32 sequence lengths
    whh0_ref,   # (H, 4H)
    wih1_ref,   # (H, 4H)
    whh1_ref,   # (H, 4H)
    b1_ref,     # (1, 4H)
    wsh_ref,    # (H, H)
    bsh_ref,    # (1, H)
    whd_ref,    # (H, 2Z)  [w_mu | w_logvar]
    bhd_ref,    # (1, 2Z)
    out_ref,    # (TC, B, 2Z)  combined [mean | logvar]
    h0_ref, c0_ref, h1_ref, c1_ref,  # (B, H) f32 VMEM carries (across chunks)
    y1_ref,     # (TC, B, H) f32 VMEM — masked layer-1 outputs for this chunk
):
    ct = pl.program_id(0)
    TC = pg0_ref.shape[0]
    B, H = h0_ref.shape
    Z2 = out_ref.shape[2]

    @pl.when(ct == 0)
    def _():
        h0_ref[...] = jnp.zeros_like(h0_ref)
        c0_ref[...] = jnp.zeros_like(c0_ref)
        h1_ref[...] = jnp.zeros_like(h1_ref)
        c1_ref[...] = jnp.zeros_like(c1_ref)

    # Resident weight blocks (already in the MXU dtype; no per-chunk casts).
    whh0 = whh0_ref[...]
    wih1 = wih1_ref[...]
    whh1 = whh1_ref[...]
    b1 = b1_ref[...]
    lens = len_ref[...]           # (B, 1) int32
    t0 = ct * TC

    def lstm_cell(gates, c_prev):
        # gate order [i | f | o | g]: one sigmoid over (B, 3H), one tanh over (B, H)
        sg = jax.nn.sigmoid(gates[:, :3 * H])
        g = jnp.tanh(gates[:, 3 * H:])
        c = sg[:, H:2 * H] * c_prev + sg[:, :H] * g
        h = sg[:, 2 * H:3 * H] * jnp.tanh(c)
        return h, c

    # ---- recurrence: fully unrolled (static indices), h/c kept as loop-carried values ----
    h0v = h0_ref[...]
    c0v = c0_ref[...]
    h1v = h1_ref[...]
    c1v = c1_ref[...]
    for s in range(TC):
        # LSTM layer 0 (input projection + bias already folded into pg0)
        g0 = pg0_ref[s] + _mm(h0v, whh0)
        h0v, c0v = lstm_cell(g0, c0v)
        # LSTM layer 1 (eval mode: inter-layer dropout is a no-op)
        g1 = _mm(h0v, wih1) + _mm(h1v, whh1) + b1
        h1v, c1v = lstm_cell(g1, c1v)
        # pad_packed_sequence mask; stash for the batched epilogue
        valid = (t0 + s) < lens                      # (B, 1)
        y1_ref[s] = jnp.where(valid, h1v, 0.0)
    h0_ref[...] = h0v
    c0_ref[...] = c0v
    h1_ref[...] = h1v
    c1_ref[...] = c1v

    # ---- batched head epilogue: one matmul pair per chunk (M = TC*B rows) ----
    # B is padded to a multiple of 8 in the wrapper, so this reshape is a layout no-op.
    y = y1_ref[...].reshape(TC * B, H)
    shared = jnp.maximum(_mm(y, wsh_ref[...]) + bsh_ref[...], 0.0)   # ReLU(Linear(H, H))
    head = _mm(shared, whd_ref[...]) + bhd_ref[...]                  # (TC*B, 2Z) = [mean|logvar]
    out_ref[...] = head.reshape(TC, B, Z2)


# --------------------------------------------------------------------------------------
# Parameter init (PyTorch layout)
# --------------------------------------------------------------------------------------
def init_params(key, input_dim, hidden_dim, z_dim):
    ks = list(jax.random.split(key, 16))
    u = lambda k, shape, s: jax.random.uniform(k, shape, jnp.float32, -s, s)
    sh = 1.0 / np.sqrt(hidden_dim)
    p = {}
    # LSTM layer 0 (input_dim -> hidden_dim) and layer 1 (hidden_dim -> hidden_dim)
    p["wih0"] = u(ks[0], (4 * hidden_dim, input_dim), sh)
    p["whh0"] = u(ks[1], (4 * hidden_dim, hidden_dim), sh)
    p["b0"] = u(ks[2], (4 * hidden_dim,), sh) + u(ks[3], (4 * hidden_dim,), sh)  # b_ih + b_hh
    p["wih1"] = u(ks[4], (4 * hidden_dim, hidden_dim), sh)
    p["whh1"] = u(ks[5], (4 * hidden_dim, hidden_dim), sh)
    p["b1"] = u(ks[6], (4 * hidden_dim,), sh) + u(ks[7], (4 * hidden_dim,), sh)
    # shared Linear(H, H) + ReLU, heads Linear(H, Z)
    p["w_sh"] = u(ks[8], (hidden_dim, hidden_dim), sh)
    p["b_sh"] = u(ks[9], (hidden_dim,), sh)
    p["w_mu"] = u(ks[10], (z_dim, hidden_dim), sh)
    p["b_mu"] = u(ks[11], (z_dim,), sh)
    p["w_lv"] = u(ks[12], (z_dim, hidden_dim), sh)
    p["b_lv"] = u(ks[13], (z_dim,), sh)
    return p


# --------------------------------------------------------------------------------------
# Encoder wrapper (weight prep + the one hoisted matmul in plain XLA, rest in Pallas)
# --------------------------------------------------------------------------------------
@functools.partial(jax.jit, static_argnames=("time_chunk",))
def encoder_forward(params, x, lengths, time_chunk=8):
    """x: (B, T, D_in) float32, lengths: (B,) int32 -> (mean, std), each (B, T, Z)."""
    B, T, D = x.shape
    H = params["whh0"].shape[1]
    Z = params["w_mu"].shape[0]

    # Batch padded to a sublane multiple (8); time padded up to the requested chunk.
    B_pad = _round_up(B, 8)
    TC = max(1, min(int(time_chunk), T))
    T_pad = _round_up(T, TC)

    x_f = x.astype(jnp.float32)
    lens = lengths.astype(jnp.int32)
    if B_pad != B:
        x_f = jnp.pad(x_f, ((0, B_pad - B), (0, 0), (0, 0)))
        lens = jnp.pad(lens, (0, B_pad - B))

    # Reorder gates [i,f,g,o] -> [i,f,o,g] once, at weight-prep time.
    wih0 = _reorder_gates(params["wih0"], H)
    whh0 = _reorder_gates(params["whh0"], H)
    b0 = _reorder_gates(params["b0"], H)
    wih1 = _reorder_gates(params["wih1"], H)
    whh1 = _reorder_gates(params["whh1"], H)
    b1 = _reorder_gates(params["b1"], H)

    # Hoisted layer-0 input projection: one large matmul, bias folded in, time-major.
    x_tbd = jnp.transpose(x_f, (1, 0, 2))                               # (T, B_pad, D)
    pg0 = jnp.einsum("tbd,dg->tbg", x_tbd, wih0.T) + b0[None, None, :]  # (T, B_pad, 4H)
    if T_pad != T:
        pg0 = jnp.pad(pg0, ((0, T_pad - T), (0, 0), (0, 0)))
    pg0 = pg0.astype(jnp.float32)

    lens2d = lens.reshape(B_pad, 1)
    whd = jnp.concatenate([params["w_mu"].T, params["w_lv"].T], axis=1).astype(_MM_DTYPE)  # (H,2Z)
    bhd = jnp.concatenate([params["b_mu"], params["b_lv"]])[None, :]                       # (1,2Z)

    full2d = lambda r, c: pl.BlockSpec((r, c), lambda ct: (0, 0))

    out_tb = pl.pallas_call(
        _fused_encoder_kernel,
        out_shape=jax.ShapeDtypeStruct((T_pad, B_pad, 2 * Z), jnp.float32),
        grid_spec=pltpu.PrefetchScalarGridSpec(
            num_scalar_prefetch=0,
            grid=(T_pad // TC,),
            in_specs=[
                pl.BlockSpec((TC, B_pad, 4 * H), lambda ct: (ct, 0, 0)),  # pre-gates chunk
                full2d(B_pad, 1),                                         # lengths
                full2d(H, 4 * H),                                         # Whh0^T
                full2d(H, 4 * H),                                         # Wih1^T
                full2d(H, 4 * H),                                         # Whh1^T
                full2d(1, 4 * H),                                         # b1
                full2d(H, H),                                             # Wsh^T
                full2d(1, H),                                             # bsh
                full2d(H, 2 * Z),                                         # [Wmu^T | Wlv^T]
                full2d(1, 2 * Z),                                         # [bmu | blv]
            ],
            out_specs=pl.BlockSpec((TC, B_pad, 2 * Z), lambda ct: (ct, 0, 0)),
            scratch_shapes=[
                pltpu.VMEM((B_pad, H), jnp.float32),       # h0
                pltpu.VMEM((B_pad, H), jnp.float32),       # c0
                pltpu.VMEM((B_pad, H), jnp.float32),       # h1
                pltpu.VMEM((B_pad, H), jnp.float32),       # c1
                pltpu.VMEM((TC, B_pad, H), jnp.float32),   # masked layer-1 outputs (chunk)
            ],
        ),
        compiler_params=pltpu.CompilerParams(
            # time recurrence must stay sequential: h/c carry across grid steps in VMEM scratch
            dimension_semantics=("arbitrary",),
            vmem_limit_bytes=64 * 1024 * 1024,
        ),
    )(
        pg0, lens2d,
        whh0.T.astype(_MM_DTYPE), wih1.T.astype(_MM_DTYPE), whh1.T.astype(_MM_DTYPE), b1[None, :],
        params["w_sh"].T.astype(_MM_DTYPE), params["b_sh"][None, :],
        whd, bhd,
    )

    # Single layout pass on the combined lane-dense output, then split + exp(0.5 * logvar).
    out = jnp.transpose(out_tb, (1, 0, 2))[:B, :T]   # (B, T, 2Z)
    mean = out[..., :Z]
    std = jnp.exp(0.5 * out[..., Z:])
    return mean, std


# --------------------------------------------------------------------------------------
# Pure-JAX reference (for correctness check; PyTorch gate order, unreordered weights)
# --------------------------------------------------------------------------------------
def _lstm_ref(x_tbd, wih, whh, b):
    H = whh.shape[1]

    def step(carry, x_t):
        h, c = carry
        g = x_t @ wih.T + h @ whh.T + b
        i = jax.nn.sigmoid(g[:, :H])
        f = jax.nn.sigmoid(g[:, H:2 * H])
        gg = jnp.tanh(g[:, 2 * H:3 * H])
        o = jax.nn.sigmoid(g[:, 3 * H:])
        c = f * c + i * gg
        h = o * jnp.tanh(c)
        return (h, c), h

    B = x_tbd.shape[1]
    init = (jnp.zeros((B, H), jnp.float32), jnp.zeros((B, H), jnp.float32))
    _, ys = jax.lax.scan(step, init, x_tbd)
    return ys


def encoder_ref(params, x, lengths):
    B, T, D = x.shape
    x_tbd = jnp.transpose(x, (1, 0, 2)).astype(jnp.float32)
    y0 = _lstm_ref(x_tbd, params["wih0"], params["whh0"], params["b0"])
    y1 = _lstm_ref(y0, params["wih1"], params["whh1"], params["b1"])
    y = jnp.transpose(y1, (1, 0, 2))
    mask = (jnp.arange(T)[None, :] < lengths[:, None]).astype(jnp.float32)[:, :, None]
    y = y * mask
    shared = jnp.maximum(y @ params["w_sh"].T + params["b_sh"], 0.0)
    mean = shared @ params["w_mu"].T + params["b_mu"]
    logvar = shared @ params["w_lv"].T + params["b_lv"]
    return mean, jnp.sqrt(jnp.exp(logvar))


# --------------------------------------------------------------------------------------
if __name__ == "__main__":
    B, T, INPUT_DIM, HIDDEN_DIM, Z_DIM = 2, 8, 16, 32, 8

    key = jax.random.PRNGKey(0)
    k_param, k_x = jax.random.split(key)
    params = init_params(k_param, INPUT_DIM, HIDDEN_DIM, Z_DIM)

    x = jax.random.normal(k_x, (B, T, INPUT_DIM), jnp.float32)
    lengths = jnp.array([8, 5], dtype=jnp.int32)  # sorted descending (pack_padded_sequence)
    # zero the padding region, as a padded batch would have
    pad_mask = (jnp.arange(T)[None, :] < lengths[:, None]).astype(jnp.float32)[:, :, None]
    x = x * pad_mask

    # time_chunk=3 with T=8 -> T padded to 9, 3 chunks: exercises cross-chunk h/c carry,
    # the batched per-chunk head epilogue, and the time-padding + mask path.
    mean, std = encoder_forward(params, x, lengths, time_chunk=3)
    jax.block_until_ready((mean, std))

    mean_r, std_r = encoder_ref(params, x, lengths)
    np.testing.assert_allclose(np.asarray(mean), np.asarray(mean_r), rtol=1e-4, atol=1e-4)
    np.testing.assert_allclose(np.asarray(std), np.asarray(std_r), rtol=1e-4, atol=1e-4)

    print("KERNEL_OK")
</pallas_src>

<mosaic_0001>
module attributes {stable_mosaic.version = 11 : i64} {
  func.func @_fused_encoder_kernel(%arg0: i32, %arg1: memref<3x8x128xf32, #tpu.memory_space<vmem>>, %arg2: memref<8x1xi32, #tpu.memory_space<vmem>>, %arg3: memref<32x128xf32, #tpu.memory_space<vmem>>, %arg4: memref<32x128xf32, #tpu.memory_space<vmem>>, %arg5: memref<32x128xf32, #tpu.memory_space<vmem>>, %arg6: memref<1x128xf32, #tpu.memory_space<vmem>>, %arg7: memref<32x32xf32, #tpu.memory_space<vmem>>, %arg8: memref<1x32xf32, #tpu.memory_space<vmem>>, %arg9: memref<32x16xf32, #tpu.memory_space<vmem>>, %arg10: memref<1x16xf32, #tpu.memory_space<vmem>>, %arg11: memref<3x8x16xf32, #tpu.memory_space<vmem>>, %arg12: memref<8x32xf32, #tpu.memory_space<vmem>>, %arg13: memref<8x32xf32, #tpu.memory_space<vmem>>, %arg14: memref<8x32xf32, #tpu.memory_space<vmem>>, %arg15: memref<8x32xf32, #tpu.memory_space<vmem>>, %arg16: memref<3x8x32xf32, #tpu.memory_space<vmem>>) attributes {dimension_semantics = [#tpu.dimension_semantics<arbitrary>], iteration_bounds = array<i64: 3>, scalar_prefetch = 0 : i64, scratch_operands = 5 : i64, tpu.core_type = #tpu.core_type<tc>, window_params = [{transform_indices = @transform_0, window_bounds = array<i64: 3, 8, 128>}, {pipeline_mode = #tpu.pipeline_mode<synchronous>, transform_indices = @transform_1, window_bounds = array<i64: 8, 1>}, {pipeline_mode = #tpu.pipeline_mode<synchronous>, transform_indices = @transform_2, window_bounds = array<i64: 32, 128>}, {pipeline_mode = #tpu.pipeline_mode<synchronous>, transform_indices = @transform_3, window_bounds = array<i64: 32, 128>}, {pipeline_mode = #tpu.pipeline_mode<synchronous>, transform_indices = @transform_4, window_bounds = array<i64: 32, 128>}, {pipeline_mode = #tpu.pipeline_mode<synchronous>, transform_indices = @transform_5, window_bounds = array<i64: 1, 128>}, {pipeline_mode = #tpu.pipeline_mode<synchronous>, transform_indices = @transform_6, window_bounds = array<i64: 32, 32>}, {pipeline_mode = #tpu.pipeline_mode<synchronous>, transform_indices = @transform_7, window_bounds = array<i64: 1, 32>}, {pipeline_mode = #tpu.pipeline_mode<synchronous>, transform_indices = @transform_8, window_bounds = array<i64: 32, 16>}, {pipeline_mode = #tpu.pipeline_mode<synchronous>, transform_indices = @transform_9, window_bounds = array<i64: 1, 16>}, {transform_indices = @transform_10, window_bounds = array<i64: 3, 8, 16>}]} {
    %c0_i32 = arith.constant 0 : i32
    %0 = arith.cmpi eq, %arg0, %c0_i32 : i32
    %1 = arith.extui %0 : i1 to i32
    %c0_i32_0 = arith.constant 0 : i32
    %2 = arith.cmpi ne, %1, %c0_i32_0 : i32
    scf.if %2 {
      %cst_77 = arith.constant 0.000000e+00 : f32
      %186 = vector.broadcast %cst_77 : f32 to vector<8x32xf32>
      %c0_78 = arith.constant 0 : index
      %c0_79 = arith.constant 0 : index
      %187 = vector.load %arg12[%c0_78, %c0_79] : memref<8x32xf32, #tpu.memory_space<vmem>>, vector<8x32xf32>
      tpu.vector_store %arg12[%c0_78, %c0_79], %186 {strides = array<i32>} : memref<8x32xf32, #tpu.memory_space<vmem>>, vector<8x32xf32>,
      %cst_80 = arith.constant 0.000000e+00 : f32
      %188 = vector.broadcast %cst_80 : f32 to vector<8x32xf32>
      %c0_81 = arith.constant 0 : index
      %c0_82 = arith.constant 0 : index
      %189 = vector.load %arg13[%c0_81, %c0_82] : memref<8x32xf32, #tpu.memory_space<vmem>>, vector<8x32xf32>
      tpu.vector_store %arg13[%c0_81, %c0_82], %188 {strides = array<i32>} : memref<8x32xf32, #tpu.memory_space<vmem>>, vector<8x32xf32>,
      %cst_83 = arith.constant 0.000000e+00 : f32
      %190 = vector.broadcast %cst_83 : f32 to vector<8x32xf32>
      %c0_84 = arith.constant 0 : index
      %c0_85 = arith.constant 0 : index
      %191 = vector.load %arg14[%c0_84, %c0_85] : memref<8x32xf32, #tpu.memory_space<vmem>>, vector<8x32xf32>
      tpu.vector_store %arg14[%c0_84, %c0_85], %190 {strides = array<i32>} : memref<8x32xf32, #tpu.memory_space<vmem>>, vector<8x32xf32>,
      %cst_86 = arith.constant 0.000000e+00 : f32
      %192 = vector.broadcast %cst_86 : f32 to vector<8x32xf32>
      %c0_87 = arith.constant 0 : index
      %c0_88 = arith.constant 0 : index
      %193 = vector.load %arg15[%c0_87, %c0_88] : memref<8x32xf32, #tpu.memory_space<vmem>>, vector<8x32xf32>
      tpu.vector_store %arg15[%c0_87, %c0_88], %192 {strides = array<i32>} : memref<8x32xf32, #tpu.memory_space<vmem>>, vector<8x32xf32>,
    } else {
    }
    %c0 = arith.constant 0 : index
    %c0_1 = arith.constant 0 : index
    %3 = vector.load %arg3[%c0, %c0_1] : memref<32x128xf32, #tpu.memory_space<vmem>>, vector<32x128xf32>
    %c0_2 = arith.constant 0 : index
    %c0_3 = arith.constant 0 : index
    %4 = vector.load %arg4[%c0_2, %c0_3] : memref<32x128xf32, #tpu.memory_space<vmem>>, vector<32x128xf32>
    %c0_4 = arith.constant 0 : index
    %c0_5 = arith.constant 0 : index
    %5 = vector.load %arg5[%c0_4, %c0_5] : memref<32x128xf32, #tpu.memory_space<vmem>>, vector<32x128xf32>
    %c0_6 = arith.constant 0 : index
    %c0_7 = arith.constant 0 : index
    %6 = vector.load %arg6[%c0_6, %c0_7] : memref<1x128xf32, #tpu.memory_space<vmem>>, vector<1x128xf32>
    %c0_8 = arith.constant 0 : index
    %c0_9 = arith.constant 0 : index
    %7 = vector.load %arg2[%c0_8, %c0_9] : memref<8x1xi32, #tpu.memory_space<vmem>>, vector<8x1xi32>
    %c3_i32 = arith.constant 3 : i32
    %8 = arith.muli %arg0, %c3_i32 : i32
    %c0_10 = arith.constant 0 : index
    %c0_11 = arith.constant 0 : index
    %9 = vector.load %arg12[%c0_10, %c0_11] : memref<8x32xf32, #tpu.memory_space<vmem>>, vector<8x32xf32>
    %c0_12 = arith.constant 0 : index
    %c0_13 = arith.constant 0 : index
    %10 = vector.load %arg13[%c0_12, %c0_13] : memref<8x32xf32, #tpu.memory_space<vmem>>, vector<8x32xf32>
    %c0_14 = arith.constant 0 : index
    %c0_15 = arith.constant 0 : index
    %11 = vector.load %arg14[%c0_14, %c0_15] : memref<8x32xf32, #tpu.memory_space<vmem>>, vector<8x32xf32>
    %c0_16 = arith.constant 0 : index
    %c0_17 = arith.constant 0 : index
    %12 = vector.load %arg15[%c0_16, %c0_17] : memref<8x32xf32, #tpu.memory_space<vmem>>, vector<8x32xf32>
    %c0_18 = arith.constant 0 : index
    %c0_19 = arith.constant 0 : index
    %c0_20 = arith.constant 0 : index
    %13 = vector.load %arg1[%c0_18, %c0_19, %c0_20] : memref<3x8x128xf32, #tpu.memory_space<vmem>>, vector<1x8x128xf32>
    %14 = vector.shape_cast %13 : vector<1x8x128xf32> to vector<8x128xf32>
    %cst = arith.constant dense<0.000000e+00> : vector<8x128xf32>
    %15 = tpu.matmul %9, %3, %cst {dimension_numbers = #tpu.dot_dimension_numbers<[1], [0], [0], [1], [0, 0, 1, 1], [], []>} : vector<8x32xf32>, vector<32x128xf32>, vector<8x128xf32> -> vector<8x128xf32>
    %16 = arith.addf %14, %15 : vector<8x128xf32>
    %17 = vector.extract_strided_slice %16 {offsets = [0, 0], sizes = [8, 96], strides = [1, 1]} : vector<8x128xf32> to vector<8x96xf32>
    %18 = arith.negf %17 : vector<8x96xf32>
    %19 = math.exp %18 : vector<8x96xf32>
    %cst_21 = arith.constant 1.000000e+00 : f32
    %20 = vector.broadcast %cst_21 : f32 to vector<8x96xf32>
    %21 = arith.addf %20, %19 : vector<8x96xf32>
    %22 = arith.divf %20, %21 : vector<8x96xf32>
    %23 = vector.extract_strided_slice %16 {offsets = [0, 96], sizes = [8, 32], strides = [1, 1]} : vector<8x128xf32> to vector<8x32xf32>
    %24 = math.tanh %23 : vector<8x32xf32>
    %25 = vector.extract_strided_slice %22 {offsets = [0, 32], sizes = [8, 32], strides = [1, 1]} : vector<8x96xf32> to vector<8x32xf32>
    %26 = arith.mulf %25, %10 : vector<8x32xf32>
    %27 = vector.extract_strided_slice %22 {offsets = [0, 0], sizes = [8, 32], strides = [1, 1]} : vector<8x96xf32> to vector<8x32xf32>
    %28 = arith.mulf %27, %24 : vector<8x32xf32>
    %29 = arith.addf %26, %28 : vector<8x32xf32>
    %30 = vector.extract_strided_slice %22 {offsets = [0, 64], sizes = [8, 32], strides = [1, 1]} : vector<8x96xf32> to vector<8x32xf32>
    %31 = math.tanh %29 : vector<8x32xf32>
    %32 = arith.mulf %30, %31 : vector<8x32xf32>
    %cst_22 = arith.constant dense<0.000000e+00> : vector<8x128xf32>
    %33 = tpu.matmul %32, %4, %cst_22 {dimension_numbers = #tpu.dot_dimension_numbers<[1], [0], [0], [1], [0, 0, 1, 1], [], []>} : vector<8x32xf32>, vector<32x128xf32>, vector<8x128xf32> -> vector<8x128xf32>
    %cst_23 = arith.constant dense<0.000000e+00> : vector<8x128xf32>
    %34 = tpu.matmul %11, %5, %cst_23 {dimension_numbers = #tpu.dot_dimension_numbers<[1], [0], [0], [1], [0, 0, 1, 1], [], []>} : vector<8x32xf32>, vector<32x128xf32>, vector<8x128xf32> -> vector<8x128xf32>
    %35 = arith.addf %33, %34 : vector<8x128xf32>
    %36 = vector.broadcast %6 : vector<1x128xf32> to vector<8x128xf32>
    %37 = arith.addf %35, %36 : vector<8x128xf32>
    %38 = vector.extract_strided_slice %37 {offsets = [0, 0], sizes = [8, 96], strides = [1, 1]} : vector<8x128xf32> to vector<8x96xf32>
    %39 = arith.negf %38 : vector<8x96xf32>
    %40 = math.exp %39 : vector<8x96xf32>
    %cst_24 = arith.constant 1.000000e+00 : f32
    %41 = vector.broadcast %cst_24 : f32 to vector<8x96xf32>
    %42 = arith.addf %41, %40 : vector<8x96xf32>
    %43 = arith.divf %41, %42 : vector<8x96xf32>
    %44 = vector.extract_strided_slice %37 {offsets = [0, 96], sizes = [8, 32], strides = [1, 1]} : vector<8x128xf32> to vector<8x32xf32>
    %45 = math.tanh %44 : vector<8x32xf32>
    %46 = vector.extract_strided_slice %43 {offsets = [0, 32], sizes = [8, 32], strides = [1, 1]} : vector<8x96xf32> to vector<8x32xf32>
    %47 = arith.mulf %46, %12 : vector<8x32xf32>
    %48 = vector.extract_strided_slice %43 {offsets = [0, 0], sizes = [8, 32], strides = [1, 1]} : vector<8x96xf32> to vector<8x32xf32>
    %49 = arith.mulf %48, %45 : vector<8x32xf32>
    %50 = arith.addf %47, %49 : vector<8x32xf32>
    %51 = vector.extract_strided_slice %43 {offsets = [0, 64], sizes = [8, 32], strides = [1, 1]} : vector<8x96xf32> to vector<8x32xf32>
    %52 = math.tanh %50 : vector<8x32xf32>
    %53 = arith.mulf %51, %52 : vector<8x32xf32>
    %c0_i32_25 = arith.constant 0 : i32
    %54 = arith.addi %8, %c0_i32_25 : i32
    %55 = vector.broadcast %54 : i32 to vector<8x1xi32>
    %56 = arith.cmpi slt, %55, %7 : vector<8x1xi32>
    %cst_26 = arith.constant 0.000000e+00 : f32
    %57 = vector.shape_cast %56 : vector<8x1xi1> to vector<8x1xi1>
    %58 = vector.broadcast %57 : vector<8x1xi1> to vector<8x32xi1>
    %59 = vector.broadcast %cst_26 : f32 to vector<8x32xf32>
    %60 = arith.select %58, %53, %59 : vector<8x32xi1>, vector<8x32xf32>
    %c0_27 = arith.constant 0 : index
    %c0_28 = arith.constant 0 : index
    %c0_29 = arith.constant 0 : index
    %61 = vector.load %arg16[%c0_27, %c0_28, %c0_29] : memref<3x8x32xf32, #tpu.memory_space<vmem>>, vector<1x8x32xf32>
    %62 = vector.shape_cast %61 : vector<1x8x32xf32> to vector<8x32xf32>
    %63 = vector.shape_cast %60 : vector<8x32xf32> to vector<1x8x32xf32>
    tpu.vector_store %arg16[%c0_27, %c0_28, %c0_29], %63 {strides = array<i32>} : memref<3x8x32xf32, #tpu.memory_space<vmem>>, vector<1x8x32xf32>,
    %c1 = arith.constant 1 : index
    %c0_30 = arith.constant 0 : index
    %c0_31 = arith.constant 0 : index
    %64 = vector.load %arg1[%c1, %c0_30, %c0_31] : memref<3x8x128xf32, #tpu.memory_space<vmem>>, vector<1x8x128xf32>
    %65 = vector.shape_cast %64 : vector<1x8x128xf32> to vector<8x128xf32>
    %cst_32 = arith.constant dense<0.000000e+00> : vector<8x128xf32>
    %66 = tpu.matmul %32, %3, %cst_32 {dimension_numbers = #tpu.dot_dimension_numbers<[1], [0], [0], [1], [0, 0, 1, 1], [], []>} : vector<8x32xf32>, vector<32x128xf32>, vector<8x128xf32> -> vector<8x128xf32>
    %67 = arith.addf %65, %66 : vector<8x128xf32>
    %68 = vector.extract_strided_slice %67 {offsets = [0, 0], sizes = [8, 96], strides = [1, 1]} : vector<8x128xf32> to vector<8x96xf32>
    %69 = arith.negf %68 : vector<8x96xf32>
    %70 = math.exp %69 : vector<8x96xf32>
    %cst_33 = arith.constant 1.000000e+00 : f32
    %71 = vector.broadcast %cst_33 : f32 to vector<8x96xf32>
    %72 = arith.addf %71, %70 : vector<8x96xf32>
    %73 = arith.divf %71, %72 : vector<8x96xf32>
    %74 = vector.extract_strided_slice %67 {offsets = [0, 96], sizes = [8, 32], strides = [1, 1]} : vector<8x128xf32> to vector<8x32xf32>
    %75 = math.tanh %74 : vector<8x32xf32>
    %76 = vector.extract_strided_slice %73 {offsets = [0, 32], sizes = [8, 32], strides = [1, 1]} : vector<8x96xf32> to vector<8x32xf32>
    %77 = arith.mulf %76, %29 : vector<8x32xf32>
    %78 = vector.extract_strided_slice %73 {offsets = [0, 0], sizes = [8, 32], strides = [1, 1]} : vector<8x96xf32> to vector<8x32xf32>
    %79 = arith.mulf %78, %75 : vector<8x32xf32>
    %80 = arith.addf %77, %79 : vector<8x32xf32>
    %81 = vector.extract_strided_slice %73 {offsets = [0, 64], sizes = [8, 32], strides = [1, 1]} : vector<8x96xf32> to vector<8x32xf32>
    %82 = math.tanh %80 : vector<8x32xf32>
    %83 = arith.mulf %81, %82 : vector<8x32xf32>
    %cst_34 = arith.constant dense<0.000000e+00> : vector<8x128xf32>
    %84 = tpu.matmul %83, %4, %cst_34 {dimension_numbers = #tpu.dot_dimension_numbers<[1], [0], [0], [1], [0, 0, 1, 1], [], []>} : vector<8x32xf32>, vector<32x128xf32>, vector<8x128xf32> -> vector<8x128xf32>
    %cst_35 = arith.constant dense<0.000000e+00> : vector<8x128xf32>
    %85 = tpu.matmul %53, %5, %cst_35 {dimension_numbers = #tpu.dot_dimension_numbers<[1], [0], [0], [1], [0, 0, 1, 1], [], []>} : vector<8x32xf32>, vector<32x128xf32>, vector<8x128xf32> -> vector<8x128xf32>
    %86 = arith.addf %84, %85 : vector<8x128xf32>
    %87 = vector.broadcast %6 : vector<1x128xf32> to vector<8x128xf32>
    %88 = arith.addf %86, %87 : vector<8x128xf32>
    %89 = vector.extract_strided_slice %88 {offsets = [0, 0], sizes = [8, 96], strides = [1, 1]} : vector<8x128xf32> to vector<8x96xf32>
    %90 = arith.negf %89 : vector<8x96xf32>
    %91 = math.exp %90 : vector<8x96xf32>
    %cst_36 = arith.constant 1.000000e+00 : f32
    %92 = vector.broadcast %cst_36 : f32 to vector<8x96xf32>
    %93 = arith.addf %92, %91 : vector<8x96xf32>
    %94 = arith.divf %92, %93 : vector<8x96xf32>
    %95 = vector.extract_strided_slice %88 {offsets = [0, 96], sizes = [8, 32], strides = [1, 1]} : vector<8x128xf32> to vector<8x32xf32>
    %96 = math.tanh %95 : vector<8x32xf32>
    %97 = vector.extract_strided_slice %94 {offsets = [0, 32], sizes = [8, 32], strides = [1, 1]} : vector<8x96xf32> to vector<8x32xf32>
    %98 = arith.mulf %97, %50 : vector<8x32xf32>
    %99 = vector.extract_strided_slice %94 {offsets = [0, 0], sizes = [8, 32], strides = [1, 1]} : vector<8x96xf32> to vector<8x32xf32>
    %100 = arith.mulf %99, %96 : vector<8x32xf32>
    %101 = arith.addf %98, %100 : vector<8x32xf32>
    %102 = vector.extract_strided_slice %94 {offsets = [0, 64], sizes = [8, 32], strides = [1, 1]} : vector<8x96xf32> to vector<8x32xf32>
    %103 = math.tanh %101 : vector<8x32xf32>
    %104 = arith.mulf %102, %103 : vector<8x32xf32>
    %c1_i32 = arith.constant 1 : i32
    %105 = arith.addi %8, %c1_i32 : i32
    %106 = vector.broadcast %105 : i32 to vector<8x1xi32>
    %107 = arith.cmpi slt, %106, %7 : vector<8x1xi32>
    %cst_37 = arith.constant 0.000000e+00 : f32
    %108 = vector.shape_cast %107 : vector<8x1xi1> to vector<8x1xi1>
    %109 = vector.broadcast %108 : vector<8x1xi1> to vector<8x32xi1>
    %110 = vector.broadcast %cst_37 : f32 to vector<8x32xf32>
    %111 = arith.select %109, %104, %110 : vector<8x32xi1>, vector<8x32xf32>
    %c1_38 = arith.constant 1 : index
    %c0_39 = arith.constant 0 : index
    %c0_40 = arith.constant 0 : index
    %112 = vector.load %arg16[%c1_38, %c0_39, %c0_40] : memref<3x8x32xf32, #tpu.memory_space<vmem>>, vector<1x8x32xf32>
    %113 = vector.shape_cast %112 : vector<1x8x32xf32> to vector<8x32xf32>
    %114 = vector.shape_cast %111 : vector<8x32xf32> to vector<1x8x32xf32>
    tpu.vector_store %arg16[%c1_38, %c0_39, %c0_40], %114 {strides = array<i32>} : memref<3x8x32xf32, #tpu.memory_space<vmem>>, vector<1x8x32xf32>,
    %c2 = arith.constant 2 : index
    %c0_41 = arith.constant 0 : index
    %c0_42 = arith.constant 0 : index
    %115 = vector.load %arg1[%c2, %c0_41, %c0_42] : memref<3x8x128xf32, #tpu.memory_space<vmem>>, vector<1x8x128xf32>
    %116 = vector.shape_cast %115 : vector<1x8x128xf32> to vector<8x128xf32>
    %cst_43 = arith.constant dense<0.000000e+00> : vector<8x128xf32>
    %117 = tpu.matmul %83, %3, %cst_43 {dimension_numbers = #tpu.dot_dimension_numbers<[1], [0], [0], [1], [0, 0, 1, 1], [], []>} : vector<8x32xf32>, vector<32x128xf32>, vector<8x128xf32> -> vector<8x128xf32>
    %118 = arith.addf %116, %117 : vector<8x128xf32>
    %119 = vector.extract_strided_slice %118 {offsets = [0, 0], sizes = [8, 96], strides = [1, 1]} : vector<8x128xf32> to vector<8x96xf32>
    %120 = arith.negf %119 : vector<8x96xf32>
    %121 = math.exp %120 : vector<8x96xf32>
    %cst_44 = arith.constant 1.000000e+00 : f32
    %122 = vector.broadcast %cst_44 : f32 to vector<8x96xf32>
    %123 = arith.addf %122, %121 : vector<8x96xf32>
    %124 = arith.divf %122, %123 : vector<8x96xf32>
    %125 = vector.extract_strided_slice %118 {offsets = [0, 96], sizes = [8, 32], strides = [1, 1]} : vector<8x128xf32> to vector<8x32xf32>
    %126 = math.tanh %125 : vector<8x32xf32>
    %127 = vector.extract_strided_slice %124 {offsets = [0, 32], sizes = [8, 32], strides = [1, 1]} : vector<8x96xf32> to vector<8x32xf32>
    %128 = arith.mulf %127, %80 : vector<8x32xf32>
    %129 = vector.extract_strided_slice %124 {offsets = [0, 0], sizes = [8, 32], strides = [1, 1]} : vector<8x96xf32> to vector<8x32xf32>
    %130 = arith.mulf %129, %126 : vector<8x32xf32>
    %131 = arith.addf %128, %130 : vector<8x32xf32>
    %132 = vector.extract_strided_slice %124 {offsets = [0, 64], sizes = [8, 32], strides = [1, 1]} : vector<8x96xf32> to vector<8x32xf32>
    %133 = math.tanh %131 : vector<8x32xf32>
    %134 = arith.mulf %132, %133 : vector<8x32xf32>
    %cst_45 = arith.constant dense<0.000000e+00> : vector<8x128xf32>
    %135 = tpu.matmul %134, %4, %cst_45 {dimension_numbers = #tpu.dot_dimension_numbers<[1], [0], [0], [1], [0, 0, 1, 1], [], []>} : vector<8x32xf32>, vector<32x128xf32>, vector<8x128xf32> -> vector<8x128xf32>
    %cst_46 = arith.constant dense<0.000000e+00> : vector<8x128xf32>
    %136 = tpu.matmul %104, %5, %cst_46 {dimension_numbers = #tpu.dot_dimension_numbers<[1], [0], [0], [1], [0, 0, 1, 1], [], []>} : vector<8x32xf32>, vector<32x128xf32>, vector<8x128xf32> -> vector<8x128xf32>
    %137 = arith.addf %135, %136 : vector<8x128xf32>
    %138 = vector.broadcast %6 : vector<1x128xf32> to vector<8x128xf32>
    %139 = arith.addf %137, %138 : vector<8x128xf32>
    %140 = vector.extract_strided_slice %139 {offsets = [0, 0], sizes = [8, 96], strides = [1, 1]} : vector<8x128xf32> to vector<8x96xf32>
    %141 = arith.negf %140 : vector<8x96xf32>
    %142 = math.exp %141 : vector<8x96xf32>
    %cst_47 = arith.constant 1.000000e+00 : f32
    %143 = vector.broadcast %cst_47 : f32 to vector<8x96xf32>
    %144 = arith.addf %143, %142 : vector<8x96xf32>
    %145 = arith.divf %143, %144 : vector<8x96xf32>
    %146 = vector.extract_strided_slice %139 {offsets = [0, 96], sizes = [8, 32], strides = [1, 1]} : vector<8x128xf32> to vector<8x32xf32>
    %147 = math.tanh %146 : vector<8x32xf32>
    %148 = vector.extract_strided_slice %145 {offsets = [0, 32], sizes = [8, 32], strides = [1, 1]} : vector<8x96xf32> to vector<8x32xf32>
    %149 = arith.mulf %148, %101 : vector<8x32xf32>
    %150 = vector.extract_strided_slice %145 {offsets = [0, 0], sizes = [8, 32], strides = [1, 1]} : vector<8x96xf32> to vector<8x32xf32>
    %151 = arith.mulf %150, %147 : vector<8x32xf32>
    %152 = arith.addf %149, %151 : vector<8x32xf32>
    %153 = vector.extract_strided_slice %145 {offsets = [0, 64], sizes = [8, 32], strides = [1, 1]} : vector<8x96xf32> to vector<8x32xf32>
    %154 = math.tanh %152 : vector<8x32xf32>
    %155 = arith.mulf %153, %154 : vector<8x32xf32>
    %c2_i32 = arith.constant 2 : i32
    %156 = arith.addi %8, %c2_i32 : i32
    %157 = vector.broadcast %156 : i32 to vector<8x1xi32>
    %158 = arith.cmpi slt, %157, %7 : vector<8x1xi32>
    %cst_48 = arith.constant 0.000000e+00 : f32
    %159 = vector.shape_cast %158 : vector<8x1xi1> to vector<8x1xi1>
    %160 = vector.broadcast %159 : vector<8x1xi1> to vector<8x32xi1>
    %161 = vector.broadcast %cst_48 : f32 to vector<8x32xf32>
    %162 = arith.select %160, %155, %161 : vector<8x32xi1>, vector<8x32xf32>
    %c2_49 = arith.constant 2 : index
    %c0_50 = arith.constant 0 : index
    %c0_51 = arith.constant 0 : index
    %163 = vector.load %arg16[%c2_49, %c0_50, %c0_51] : memref<3x8x32xf32, #tpu.memory_space<vmem>>, vector<1x8x32xf32>
    %164 = vector.shape_cast %163 : vector<1x8x32xf32> to vector<8x32xf32>
    %165 = vector.shape_cast %162 : vector<8x32xf32> to vector<1x8x32xf32>
    tpu.vector_store %arg16[%c2_49, %c0_50, %c0_51], %165 {strides = array<i32>} : memref<3x8x32xf32, #tpu.memory_space<vmem>>, vector<1x8x32xf32>,
    %c0_52 = arith.constant 0 : index
    %c0_53 = arith.constant 0 : index
    %166 = vector.load %arg12[%c0_52, %c0_53] : memref<8x32xf32, #tpu.memory_space<vmem>>, vector<8x32xf32>
    tpu.vector_store %arg12[%c0_52, %c0_53], %134 {strides = array<i32>} : memref<8x32xf32, #tpu.memory_space<vmem>>, vector<8x32xf32>,
    %c0_54 = arith.constant 0 : index
    %c0_55 = arith.constant 0 : index
    %167 = vector.load %arg13[%c0_54, %c0_55] : memref<8x32xf32, #tpu.memory_space<vmem>>, vector<8x32xf32>
    tpu.vector_store %arg13[%c0_54, %c0_55], %131 {strides = array<i32>} : memref<8x32xf32, #tpu.memory_space<vmem>>, vector<8x32xf32>,
    %c0_56 = arith.constant 0 : index
    %c0_57 = arith.constant 0 : index
    %168 = vector.load %arg14[%c0_56, %c0_57] : memref<8x32xf32, #tpu.memory_space<vmem>>, vector<8x32xf32>
    tpu.vector_store %arg14[%c0_56, %c0_57], %155 {strides = array<i32>} : memref<8x32xf32, #tpu.memory_space<vmem>>, vector<8x32xf32>,
    %c0_58 = arith.constant 0 : index
    %c0_59 = arith.constant 0 : index
    %169 = vector.load %arg15[%c0_58, %c0_59] : memref<8x32xf32, #tpu.memory_space<vmem>>, vector<8x32xf32>
    tpu.vector_store %arg15[%c0_58, %c0_59], %152 {strides = array<i32>} : memref<8x32xf32, #tpu.memory_space<vmem>>, vector<8x32xf32>,
    %c0_60 = arith.constant 0 : index
    %c0_61 = arith.constant 0 : index
    %c0_62 = arith.constant 0 : index
    %170 = vector.load %arg16[%c0_60, %c0_61, %c0_62] : memref<3x8x32xf32, #tpu.memory_space<vmem>>, vector<3x8x32xf32>
    %171 = vector.shape_cast %170 : vector<3x8x32xf32> to vector<24x32xf32>
    %c0_63 = arith.constant 0 : index
    %c0_64 = arith.constant 0 : index
    %172 = vector.load %arg7[%c0_63, %c0_64] : memref<32x32xf32, #tpu.memory_space<vmem>>, vector<32x32xf32>
    %cst_65 = arith.constant dense<0.000000e+00> : vector<24x32xf32>
    %173 = tpu.matmul %171, %172, %cst_65 {dimension_numbers = #tpu.dot_dimension_numbers<[1], [0], [0], [1], [0, 0, 1, 1], [], []>} : vector<24x32xf32>, vector<32x32xf32>, vector<24x32xf32> -> vector<24x32xf32>
    %c0_66 = arith.constant 0 : index
    %c0_67 = arith.constant 0 : index
    %174 = vector.load %arg8[%c0_66, %c0_67] : memref<1x32xf32, #tpu.memory_space<vmem>>, vector<1x32xf32>
    %175 = vector.broadcast %174 : vector<1x32xf32> to vector<24x32xf32>
    %176 = arith.addf %173, %175 : vector<24x32xf32>
    %cst_68 = arith.constant 0.000000e+00 : f32
    %177 = vector.broadcast %cst_68 : f32 to vector<24x32xf32>
    %178 = arith.maximumf %176, %177 : vector<24x32xf32>
    %c0_69 = arith.constant 0 : index
    %c0_70 = arith.constant 0 : index
    %179 = vector.load %arg9[%c0_69, %c0_70] : memref<32x16xf32, #tpu.memory_space<vmem>>, vector<32x16xf32>
    %cst_71 = arith.constant dense<0.000000e+00> : vector<24x16xf32>
    %180 = tpu.matmul %178, %179, %cst_71 {dimension_numbers = #tpu.dot_dimension_numbers<[1], [0], [0], [1], [0, 0, 1, 1], [], []>} : vector<24x32xf32>, vector<32x16xf32>, vector<24x16xf32> -> vector<24x16xf32>
    %c0_72 = arith.constant 0 : index
    %c0_73 = arith.constant 0 : index
    %181 = vector.load %arg10[%c0_72, %c0_73] : memref<1x16xf32, #tpu.memory_space<vmem>>, vector<1x16xf32>
    %182 = vector.broadcast %181 : vector<1x16xf32> to vector<24x16xf32>
    %183 = arith.addf %180, %182 : vector<24x16xf32>
    %184 = vector.shape_cast %183 : vector<24x16xf32> to vector<3x8x16xf32>
    %c0_74 = arith.constant 0 : index
    %c0_75 = arith.constant 0 : index
    %c0_76 = arith.constant 0 : index
    %185 = vector.load %arg11[%c0_74, %c0_75, %c0_76] : memref<3x8x16xf32, #tpu.memory_space<vmem>>, vector<3x8x16xf32>
    tpu.vector_store %arg11[%c0_74, %c0_75, %c0_76], %184 {strides = array<i32>} : memref<3x8x16xf32, #tpu.memory_space<vmem>>, vector<3x8x16xf32>,
    return
  }
  func.func @transform_0(%arg0: i32) -> (i32, i32, i32) {
    %c0_i32 = arith.constant 0 : i32
    %c0_i32_0 = arith.constant 0 : i32
    %c0_i32_1 = arith.constant 0 : i32
    return %arg0, %c0_i32, %c0_i32_0 : i32, i32, i32
  }
  func.func @transform_1(%arg0: i32) -> (i32, i32) {
    %c0_i32 = arith.constant 0 : i32
    %c0_i32_0 = arith.constant 0 : i32
    %c0_i32_1 = arith.constant 0 : i32
    return %c0_i32, %c0_i32_0 : i32, i32
  }
  func.func @transform_2(%arg0: i32) -> (i32, i32) {
    %c0_i32 = arith.constant 0 : i32
    %c0_i32_0 = arith.constant 0 : i32
    %c0_i32_1 = arith.constant 0 : i32
    return %c0_i32, %c0_i32_0 : i32, i32
  }
  func.func @transform_3(%arg0: i32) -> (i32, i32) {
    %c0_i32 = arith.constant 0 : i32
    %c0_i32_0 = arith.constant 0 : i32
    %c0_i32_1 = arith.constant 0 : i32
    return %c0_i32, %c0_i32_0 : i32, i32
  }
  func.func @transform_4(%arg0: i32) -> (i32, i32) {
    %c0_i32 = arith.constant 0 : i32
    %c0_i32_0 = arith.constant 0 : i32
    %c0_i32_1 = arith.constant 0 : i32
    return %c0_i32, %c0_i32_0 : i32, i32
  }
  func.func @transform_5(%arg0: i32) -> (i32, i32) {
    %c0_i32 = arith.constant 0 : i32
    %c0_i32_0 = arith.constant 0 : i32
    %c0_i32_1 = arith.constant 0 : i32
    return %c0_i32, %c0_i32_0 : i32, i32
  }
  func.func @transform_6(%arg0: i32) -> (i32, i32) {
    %c0_i32 = arith.constant 0 : i32
    %c0_i32_0 = arith.constant 0 : i32
    %c0_i32_1 = arith.constant 0 : i32
    return %c0_i32, %c0_i32_0 : i32, i32
  }
  func.func @transform_7(%arg0: i32) -> (i32, i32) {
    %c0_i32 = arith.constant 0 : i32
    %c0_i32_0 = arith.constant 0 : i32
    %c0_i32_1 = arith.constant 0 : i32
    return %c0_i32, %c0_i32_0 : i32, i32
  }
  func.func @transform_8(%arg0: i32) -> (i32, i32) {
    %c0_i32 = arith.constant 0 : i32
    %c0_i32_0 = arith.constant 0 : i32
    %c0_i32_1 = arith.constant 0 : i32
    return %c0_i32, %c0_i32_0 : i32, i32
  }
  func.func @transform_9(%arg0: i32) -> (i32, i32) {
    %c0_i32 = arith.constant 0 : i32
    %c0_i32_0 = arith.constant 0 : i32
    %c0_i32_1 = arith.constant 0 : i32
    return %c0_i32, %c0_i32_0 : i32, i32
  }
  func.func @transform_10(%arg0: i32) -> (i32, i32, i32) {
    %c0_i32 = arith.constant 0 : i32
    %c0_i32_0 = arith.constant 0 : i32
    %c0_i32_1 = arith.constant 0 : i32
    return %arg0, %c0_i32, %c0_i32_0 : i32, i32, i32
  }
}

</mosaic_0001>

<llo_original>
// kernel: encoder_forward.1
$region0: #{encoder_forward.1}
  #allocation0 [shape = 'u32[]', space=smem, size = 0x4, offset = 0x4, fixed_abs, tag = 'smem constant byte address 0x4 - core index']
  #allocation1 [shape = 'u32[144,128]{1,0:T(1,128)}', space=vmem, size = 0x12000, scoped, tag = 'internal scratch']
  #allocation2 [shape = 'f32[8,32]{1,0:T(8,128)}', space=vmem, size = 0x1000, scoped, tag = 'scratch operand']
  #allocation3 [shape = 'f32[8,32]{1,0:T(8,128)}', space=vmem, size = 0x1000, scoped, tag = 'scratch operand']
  #allocation4 [shape = 'f32[8,32]{1,0:T(8,128)}', space=vmem, size = 0x1000, scoped, tag = 'scratch operand']
  #allocation5 [shape = 'f32[8,32]{1,0:T(8,128)}', space=vmem, size = 0x1000, scoped, tag = 'scratch operand']
  #allocation6 [shape = 'f32[3,8,32]{2,1,0:T(8,128)}', space=vmem, size = 0x3000, scoped, tag = 'scratch operand']
  %s0 = inlined_call_operand.hbm [shape: f32[9,8,128], index: 0, kind: input, shape index: {}]
  %s1 = inlined_call_operand.hbm [shape: s32[8,1], index: 1, kind: input, shape index: {}]
  %s2 = inlined_call_operand.hbm [shape: f32[32,128], index: 2, kind: input, shape index: {}]
  %s3 = inlined_call_operand.hbm [shape: f32[32,128], index: 3, kind: input, shape index: {}]
  %s4 = inlined_call_operand.hbm [shape: f32[32,128], index: 4, kind: input, shape index: {}]
  %s5 = inlined_call_operand.hbm [shape: f32[1,128], index: 5, kind: input, shape index: {}]
  %s6 = inlined_call_operand.hbm [shape: f32[32,32], index: 6, kind: input, shape index: {}]
  %s7 = inlined_call_operand.hbm [shape: f32[1,32], index: 7, kind: input, shape index: {}]
  %s8 = inlined_call_operand.hbm [shape: f32[32,16], index: 8, kind: input, shape index: {}]
  %s9 = inlined_call_operand.hbm [shape: f32[1,16], index: 9, kind: input, shape index: {}]
  %s10 = inlined_call_operand.hbm [shape: f32[9,8,16], index: 10, kind: output, shape index: {}]
  %s11 = sld [smem:[#allocation0]]
  $region117: #{encoder_forward.1} parent=0
    _
  %s13 = ssub.s32 1, %s11
  %s14 = scalar_select 0, %s13, %s11
  $region1: #{encoder_forward.1} parent=0
    #allocation7 [shape = 'u8[24576]{0}', space=vmem, size = 0x6000, scoped, tag = 'input window, operand 0']
    #allocation8 [shape = 's32[2]{0}', space=sflag, size = 0x8, scoped, tag = 'scoped memory for encoder_forward.1']
    #allocation9 [shape = 's32[2]{0}', space=sflag, size = 0x8, scoped, tag = 'scoped memory for encoder_forward.1']
    #allocation10 [shape = 'u8[4096]{0}', space=vmem, size = 0x1000, scoped, tag = 'input window, operand 1, single buffered']
    #allocation11 [shape = 's32[1]{0}', space=sflag, size = 0x4, scoped, tag = 'scoped memory for encoder_forward.1']
    #allocation12 [shape = 'u8[16384]{0}', space=vmem, size = 0x4000, scoped, tag = 'input window, operand 2, single buffered']
    #allocation13 [shape = 'u8[16384]{0}', space=vmem, size = 0x4000, scoped, tag = 'input window, operand 3, single buffered']
    #allocation14 [shape = 's32[1]{0}', space=sflag, size = 0x4, scoped, tag = 'scoped memory for encoder_forward.1']
    #allocation15 [shape = 'u8[16384]{0}', space=vmem, size = 0x4000, scoped, tag = 'input window, operand 4, single buffered']
    #allocation16 [shape = 'u8[512]{0}', space=vmem, size = 0x400, scoped, tag = 'input window, operand 5, single buffered']
    #allocation17 [shape = 's32[1]{0}', space=sflag, size = 0x4, scoped, tag = 'scoped memory for encoder_forward.1']
    #allocation18 [shape = 'u8[16384]{0}', space=vmem, size = 0x4000, scoped, tag = 'input window, operand 6, single buffered']
    #allocation19 [shape = 'u8[512]{0}', space=vmem, size = 0x400, scoped, tag = 'input window, operand 7, single buffered']
    #allocation20 [shape = 's32[1]{0}', space=sflag, size = 0x4, scoped, tag = 'scoped memory for encoder_forward.1']
    #allocation21 [shape = 'u8[16384]{0}', space=vmem, size = 0x4000, scoped, tag = 'input window, operand 8, single buffered']
    #allocation22 [shape = 'u8[512]{0}', space=vmem, size = 0x400, scoped, tag = 'input window, operand 9, single buffered']
    #allocation23 [shape = 's32[1]{0}', space=sflag, size = 0x4, scoped, tag = 'scoped memory for encoder_forward.1']
    #allocation24 [shape = 'u8[24576]{0}', space=vmem, size = 0x6000, scoped, tag = 'output window, operand 0']
    %15 = vsyncpa [#allocation8], 0
    %s16 = scalar_lea.sflag [#allocation8], 1
    %17 = vsyncpa %s16, 0
    %18 = vsyncpa [#allocation11], 0
    %19 = vsyncpa [#allocation14], 0
    %20 = vsyncpa [#allocation17], 0
    %21 = vsyncpa [#allocation20], 0
    %22 = vsyncpa [#allocation23], 0
    %23 = vsyncpa [#allocation9], 0
    %s24 = scalar_lea.sflag [#allocation9], 1
    %25 = vsyncpa %s24, 0
    loop: start=0, step=1, limit=5
    $region2: #{encoder_forward.1} parent=1 // loop_pre_header
      _
    $region3: #{encoder_forward.1} parent=1 // loop_header
      %s27 = sphi 0, %s31
      %p28 = scmp.ge.s32.totalorder %s27, 5
      %s37 = sphi 0, %s39
      %s40 = sphi 0, %s37
      %s41 = sphi 0, %s40
      %s57 = sphi 0, %s41
      %s61 = sphi 0, %s61
      %s63 = sphi 0, %s61
      %s64 = sphi 0, %s63
      %s78 = sphi 0, %s64
      %s82 = sphi 0, %s82
      %s84 = sphi 0, %s82
      %s85 = sphi 0, %s84
      %s99 = sphi 0, %s85
      %s103 = sphi 0, %s103
      %s105 = sphi 0, %s103
      %s106 = sphi 0, %s105
      %s120 = sphi 0, %s106
      %s124 = sphi 0, %s124
      %s126 = sphi 0, %s124
      %s127 = sphi 0, %s126
      %s141 = sphi 0, %s127
      %s145 = sphi 0, %s145
      %s147 = sphi 0, %s145
      %s148 = sphi 0, %s147
      %s162 = sphi 0, %s148
      %s166 = sphi 0, %s166
      %s168 = sphi 0, %s166
      %s169 = sphi 0, %s168
      %s183 = sphi 0, %s169
      %s187 = sphi 0, %s187
      %s189 = sphi 0, %s187
      %s190 = sphi 0, %s189
      %s204 = sphi 0, %s190
      %s208 = sphi 0, %s208
      %s210 = sphi 0, %s208
      %s211 = sphi 0, %s210
      %s225 = sphi 0, %s211
      %s229 = sphi 0, %s229
      %s231 = sphi 0, %s229
      %s232 = sphi 0, %s231
      %s246 = sphi 0, %s232
      %s252 = sphi 0, %s254
      %s255 = sphi 0, %s252
      %s256 = sphi 0, %s255
      %s272 = sphi 0, %s256
    $region4: #{encoder_forward.1} parent=1 // loop_header_branch
      %30 = sbr.rel (%p28) target = $region8
    $region5: #{encoder_forward.1} parent=1 // loop_body
      %s32 = ssub.s32 %s27, 1
      %s33 = ssub.s32 %s27, 2
      %s34 = sadd.s32 %s27, 1
      %s35 = ssub.s32 %s27, %s34
      %p36 = scmp.eq.s32.totalorder %s35, 0
      %s38 = sadd.s32 %s37, 1
      %s39 = scalar_select %p36, %s37, %s38
      %p42 = pneg %p36
      %p43 = scmp.eq.s32.totalorder %s27, 2
      %p44 = por %p42, %p43
      %p45 = scmp.ne.s32.totalorder %s37, %s40
      %p46 = scmp.eq.s32.totalorder %s27, 0
      %p47 = por %p45, %p46
      %p48 = scmp.ne.s32.totalorder %s37, %s40
      %p49 = scmp.eq.s32.totalorder %s32, 2
      %p50 = por %p48, %p49
      %p51 = scmp.ne.s32.totalorder %s40, %s41
      %p52 = scmp.eq.s32.totalorder %s32, 0
      %p53 = por %p51, %p52
      %p54 = scmp.ne.s32.totalorder %s40, %s41
      %p55 = scmp.eq.s32.totalorder %s33, 2
      %p56 = por %p54, %p55
      %p58 = scmp.ne.s32.totalorder %s41, %s57
      %p59 = scmp.eq.s32.totalorder %s33, 0
      %p60 = por %p58, %p59
      %s62 = sadd.s32 %s61, 1
      %p65 = scmp.eq.s32.totalorder %s27, 2
      %p66 = scmp.ne.s32.totalorder %s61, %s63
      %p67 = scmp.eq.s32.totalorder %s27, 0
      %p68 = por %p66, %p67
      %p69 = scmp.ne.s32.totalorder %s61, %s63
      %p70 = scmp.eq.s32.totalorder %s32, 2
      %p71 = por %p69, %p70
      %p72 = scmp.ne.s32.totalorder %s63, %s64
      %p73 = scmp.eq.s32.totalorder %s32, 0
      %p74 = por %p72, %p73
      %p75 = scmp.ne.s32.totalorder %s63, %s64
      %p76 = scmp.eq.s32.totalorder %s33, 2
      %p77 = por %p75, %p76
      %p79 = scmp.ne.s32.totalorder %s64, %s78
      %p80 = scmp.eq.s32.totalorder %s33, 0
      %p81 = por %p79, %p80
      %s83 = sadd.s32 %s82, 1
      %p86 = scmp.eq.s32.totalorder %s27, 2
      %p87 = scmp.ne.s32.totalorder %s82, %s84
      %p88 = scmp.eq.s32.totalorder %s27, 0
      %p89 = por %p87, %p88
      %p90 = scmp.ne.s32.totalorder %s82, %s84
      %p91 = scmp.eq.s32.totalorder %s32, 2
      %p92 = por %p90, %p91
      %p93 = scmp.ne.s32.totalorder %s84, %s85
      %p94 = scmp.eq.s32.totalorder %s32, 0
      %p95 = por %p93, %p94
      %p96 = scmp.ne.s32.totalorder %s84, %s85
      %p97 = scmp.eq.s32.totalorder %s33, 2
      %p98 = por %p96, %p97
      %p100 = scmp.ne.s32.totalorder %s85, %s99
      %p101 = scmp.eq.s32.totalorder %s33, 0
      %p102 = por %p100, %p101
      %s104 = sadd.s32 %s103, 1
      %p107 = scmp.eq.s32.totalorder %s27, 2
      %p108 = scmp.ne.s32.totalorder %s103, %s105
      %p109 = scmp.eq.s32.totalorder %s27, 0
      %p110 = por %p108, %p109
      %p111 = scmp.ne.s32.totalorder %s103, %s105
      %p112 = scmp.eq.s32.totalorder %s32, 2
      %p113 = por %p111, %p112
      %p114 = scmp.ne.s32.totalorder %s105, %s106
      %p115 = scmp.eq.s32.totalorder %s32, 0
      %p116 = por %p114, %p115
      %p117 = scmp.ne.s32.totalorder %s105, %s106
      %p118 = scmp.eq.s32.totalorder %s33, 2
      %p119 = por %p117, %p118
      %p121 = scmp.ne.s32.totalorder %s106, %s120
      %p122 = scmp.eq.s32.totalorder %s33, 0
      %p123 = por %p121, %p122
      %s125 = sadd.s32 %s124, 1
      %p128 = scmp.eq.s32.totalorder %s27, 2
      %p129 = scmp.ne.s32.totalorder %s124, %s126
      %p130 = scmp.eq.s32.totalorder %s27, 0
      %p131 = por %p129, %p130
      %p132 = scmp.ne.s32.totalorder %s124, %s126
      %p133 = scmp.eq.s32.totalorder %s32, 2
      %p134 = por %p132, %p133
      %p135 = scmp.ne.s32.totalorder %s126, %s127
      %p136 = scmp.eq.s32.totalorder %s32, 0
      %p137 = por %p135, %p136
      %p138 = scmp.ne.s32.totalorder %s126, %s127
      %p139 = scmp.eq.s32.totalorder %s33, 2
      %p140 = por %p138, %p139
      %p142 = scmp.ne.s32.totalorder %s127, %s141
      %p143 = scmp.eq.s32.totalorder %s33, 0
      %p144 = por %p142, %p143
      %s146 = sadd.s32 %s145, 1
      %p149 = scmp.eq.s32.totalorder %s27, 2
      %p150 = scmp.ne.s32.totalorder %s145, %s147
      %p151 = scmp.eq.s32.totalorder %s27, 0
      %p152 = por %p150, %p151
      %p153 = scmp.ne.s32.totalorder %s145, %s147
      %p154 = scmp.eq.s32.totalorder %s32, 2
      %p155 = por %p153, %p154
      %p156 = scmp.ne.s32.totalorder %s147, %s148
      %p157 = scmp.eq.s32.totalorder %s32, 0
      %p158 = por %p156, %p157
      %p159 = scmp.ne.s32.totalorder %s147, %s148
      %p160 = scmp.eq.s32.totalorder %s33, 2
      %p161 = por %p159, %p160
      %p163 = scmp.ne.s32.totalorder %s148, %s162
      %p164 = scmp.eq.s32.totalorder %s33, 0
      %p165 = por %p163, %p164
      %s167 = sadd.s32 %s166, 1
      %p170 = scmp.eq.s32.totalorder %s27, 2
      %p171 = scmp.ne.s32.totalorder %s166, %s168
      %p172 = scmp.eq.s32.totalorder %s27, 0
      %p173 = por %p171, %p172
      %p174 = scmp.ne.s32.totalorder %s166, %s168
      %p175 = scmp.eq.s32.totalorder %s32, 2
      %p176 = por %p174, %p175
      %p177 = scmp.ne.s32.totalorder %s168, %s169
      %p178 = scmp.eq.s32.totalorder %s32, 0
      %p179 = por %p177, %p178
      %p180 = scmp.ne.s32.totalorder %s168, %s169
      %p181 = scmp.eq.s32.totalorder %s33, 2
      %p182 = por %p180, %p181
      %p184 = scmp.ne.s32.totalorder %s169, %s183
      %p185 = scmp.eq.s32.totalorder %s33, 0
      %p186 = por %p184, %p185
      %s188 = sadd.s32 %s187, 1
      %p191 = scmp.eq.s32.totalorder %s27, 2
      %p192 = scmp.ne.s32.totalorder %s187, %s189
      %p193 = scmp.eq.s32.totalorder %s27, 0
      %p194 = por %p192, %p193
      %p195 = scmp.ne.s32.totalorder %s187, %s189
      %p196 = scmp.eq.s32.totalorder %s32, 2
      %p197 = por %p195, %p196
      %p198 = scmp.ne.s32.totalorder %s189, %s190
      %p199 = scmp.eq.s32.totalorder %s32, 0
      %p200 = por %p198, %p199
      %p201 = scmp.ne.s32.totalorder %s189, %s190
      %p202 = scmp.eq.s32.totalorder %s33, 2
      %p203 = por %p201, %p202
      %p205 = scmp.ne.s32.totalorder %s190, %s204
      %p206 = scmp.eq.s32.totalorder %s33, 0
      %p207 = por %p205, %p206
      %s209 = sadd.s32 %s208, 1
      %p212 = scmp.eq.s32.totalorder %s27, 2
      %p213 = scmp.ne.s32.totalorder %s208, %s210
      %p214 = scmp.eq.s32.totalorder %s27, 0
      %p215 = por %p213, %p214
      %p216 = scmp.ne.s32.totalorder %s208, %s210
      %p217 = scmp.eq.s32.totalorder %s32, 2
      %p218 = por %p216, %p217
      %p219 = scmp.ne.s32.totalorder %s210, %s211
      %p220 = scmp.eq.s32.totalorder %s32, 0
      %p221 = por %p219, %p220
      %p222 = scmp.ne.s32.totalorder %s210, %s211
      %p223 = scmp.eq.s32.totalorder %s33, 2
      %p224 = por %p222, %p223
      %p226 = scmp.ne.s32.totalorder %s211, %s225
      %p227 = scmp.eq.s32.totalorder %s33, 0
      %p228 = por %p226, %p227
      %s230 = sadd.s32 %s229, 1
      %p233 = scmp.eq.s32.totalorder %s27, 2
      %p234 = scmp.ne.s32.totalorder %s229, %s231
      %p235 = scmp.eq.s32.totalorder %s27, 0
      %p236 = por %p234, %p235
      %p237 = scmp.ne.s32.totalorder %s229, %s231
      %p238 = scmp.eq.s32.totalorder %s32, 2
      %p239 = por %p237, %p238
      %p240 = scmp.ne.s32.totalorder %s231, %s232
      %p241 = scmp.eq.s32.totalorder %s32, 0
      %p242 = por %p240, %p241
      %p243 = scmp.ne.s32.totalorder %s231, %s232
      %p244 = scmp.eq.s32.totalorder %s33, 2
      %p245 = por %p243, %p244
      %p247 = scmp.ne.s32.totalorder %s232, %s246
      %p248 = scmp.eq.s32.totalorder %s33, 0
      %p249 = por %p247, %p248
      %s250 = ssub.s32 %s27, %s34
      %p251 = scmp.eq.s32.totalorder %s250, 0
      %s253 = sadd.s32 %s252, 1
      %s254 = scalar_select %p251, %s252, %s253
      %p257 = pneg %p251
      %p258 = scmp.eq.s32.totalorder %s27, 2
      %p259 = por %p257, %p258
      %p260 = scmp.ne.s32.totalorder %s252, %s255
      %p261 = scmp.eq.s32.totalorder %s27, 0
      %p262 = por %p260, %p261
      %p263 = scmp.ne.s32.totalorder %s252, %s255
      %p264 = scmp.eq.s32.totalorder %s32, 2
      %p265 = por %p263, %p264
      %p266 = scmp.ne.s32.totalorder %s255, %s256
      %p267 = scmp.eq.s32.totalorder %s32, 0
      %p268 = por %p266, %p267
      %p269 = scmp.ne.s32.totalorder %s255, %s256
      %p270 = scmp.eq.s32.totalorder %s33, 2
      %p271 = por %p269, %p270
      %p273 = scmp.ne.s32.totalorder %s256, %s272
      %p274 = scmp.eq.s32.totalorder %s33, 0
      %p275 = por %p273, %p274
      %p276 = scmp.le.s32.totalorder 1, %s27
      %p277 = scmp.lt.s32.totalorder %s27, 4
      %p278 = pnand %p276, %p277
      %p279 = pneg %p278
      // Predicated region
      $region9: #{encoder_forward.1} parent=5 // pred_check
        _
      $region10: #{encoder_forward.1} parent=5 // pred_check_branch
        %281 = sbr.rel (%p278) target = $region12
      $region11: #{encoder_forward.1} parent=5 // pred_region
        %s282 = ssub.s32 %s27, 1
        // Predicated region
        $region13: #{encoder_forward.1} parent=11 // pred_check
          %p283 = pneg %p74
        $region14: #{encoder_forward.1} parent=11 // pred_check_branch
          %285 = sbr.rel (%p283) target = $region16
        $region15: #{encoder_forward.1} parent=11 // pred_region
          %s287 = ssub.s32 128, 128
          %288 = vsyncadd [#allocation11], %s287
          %s290 = sshll.u32 [#allocation10], 4
          %s291 = int_to_ptr.vmem [resolvable:$true] %s290
          %293 = dma.hbm_to_vmem [thread:$0]  %s1, 128, %s291, [#allocation11]
        $region16: #{encoder_forward.1} parent=11 // pred_fallthru
          _
        // Predicated region
        $region17: #{encoder_forward.1} parent=11 // pred_check
          %p294 = pneg %p95
        $region18: #{encoder_forward.1} parent=11 // pred_check_branch
          %296 = sbr.rel (%p294) target = $region20
        $region19: #{encoder_forward.1} parent=11 // pred_region
          %s298 = ssub.s32 512, 512
          %299 = vsyncadd [#allocation11], %s298
          %s300 = sshll.u32 [#allocation12], 4
          %s301 = int_to_ptr.vmem [resolvable:$true] %s300
          %306 = dma.hbm_to_vmem [thread:$0]  %s2, 512, %s301, [#allocation11], 128, 128, 8
        $region20: #{encoder_forward.1} parent=11 // pred_fallthru
          _
        // Predicated region
        $region21: #{encoder_forward.1} parent=11 // pred_check
          %p307 = pneg %p116
        $region22: #{encoder_forward.1} parent=11 // pred_check_branch
          %309 = sbr.rel (%p307) target = $region24
        $region23: #{encoder_forward.1} parent=11 // pred_region
          %s311 = ssub.s32 512, 512
          %312 = vsyncadd [#allocation14], %s311
          %s313 = sshll.u32 [#allocation13], 4
          %s314 = int_to_ptr.vmem [resolvable:$true] %s313
          %319 = dma.hbm_to_vmem [thread:$0]  %s3, 512, %s314, [#allocation14], 128, 128, 8
        $region24: #{encoder_forward.1} parent=11 // pred_fallthru
          _
        // Predicated region
        $region25: #{encoder_forward.1} parent=11 // pred_check
          %p320 = pneg %p137
        $region26: #{encoder_forward.1} parent=11 // pred_check_branch
          %322 = sbr.rel (%p320) target = $region28
        $region27: #{encoder_forward.1} parent=11 // pred_region
          %s324 = ssub.s32 512, 512
          %325 = vsyncadd [#allocation14], %s324
          %s326 = sshll.u32 [#allocation15], 4
          %s327 = int_to_ptr.vmem [resolvable:$true] %s326
          %332 = dma.hbm_to_vmem [thread:$0]  %s4, 512, %s327, [#allocation14], 128, 128, 8
        $region28: #{encoder_forward.1} parent=11 // pred_fallthru
          _
        // Predicated region
        $region29: #{encoder_forward.1} parent=11 // pred_check
          %p333 = pneg %p158
        $region30: #{encoder_forward.1} parent=11 // pred_check_branch
          %335 = sbr.rel (%p333) target = $region32
        $region31: #{encoder_forward.1} parent=11 // pred_region
          %s337 = ssub.s32 16, 16
          %338 = vsyncadd [#allocation17], %s337
          %s340 = sshll.u32 [#allocation16], 4
          %s341 = int_to_ptr.vmem [resolvable:$true] %s340
          %343 = dma.hbm_to_vmem [thread:$0]  %s5, 16, %s341, [#allocation17]
        $region32: #{encoder_forward.1} parent=11 // pred_fallthru
          _
        // Predicated region
        $region33: #{encoder_forward.1} parent=11 // pred_check
          %p344 = pneg %p179
        $region34: #{encoder_forward.1} parent=11 // pred_check_branch
          %346 = sbr.rel (%p344) target = $region36
        $region35: #{encoder_forward.1} parent=11 // pred_region
          %s348 = ssub.s32 512, 512
          %349 = vsyncadd [#allocation17], %s348
          %s350 = sshll.u32 [#allocation18], 4
          %s351 = int_to_ptr.vmem [resolvable:$true] %s350
          %356 = dma.hbm_to_vmem [thread:$0]  %s6, 512, %s351, [#allocation17], 128, 128, 8
        $region36: #{encoder_forward.1} parent=11 // pred_fallthru
          _
        // Predicated region
        $region37: #{encoder_forward.1} parent=11 // pred_check
          %p357 = pneg %p200
        $region38: #{encoder_forward.1} parent=11 // pred_check_branch
          %359 = sbr.rel (%p357) target = $region40
        $region39: #{encoder_forward.1} parent=11 // pred_region
          %s361 = ssub.s32 16, 16
          %362 = vsyncadd [#allocation20], %s361
          %s364 = sshll.u32 [#allocation19], 4
          %s365 = int_to_ptr.vmem [resolvable:$true] %s364
          %367 = dma.hbm_to_vmem [thread:$0]  %s7, 16, %s365, [#allocation20]
        $region40: #{encoder_forward.1} parent=11 // pred_fallthru
          _
        // Predicated region
        $region41: #{encoder_forward.1} parent=11 // pred_check
          %p368 = pneg %p221
        $region42: #{encoder_forward.1} parent=11 // pred_check_branch
          %370 = sbr.rel (%p368) target = $region44
        $region43: #{encoder_forward.1} parent=11 // pred_region
          %s372 = ssub.s32 512, 512
          %373 = vsyncadd [#allocation20], %s372
          %s374 = sshll.u32 [#allocation21], 4
          %s375 = int_to_ptr.vmem [resolvable:$true] %s374
          %380 = dma.hbm_to_vmem [thread:$0]  %s8, 512, %s375, [#allocation20], 128, 128, 8
        $region44: #{encoder_forward.1} parent=11 // pred_fallthru
          _
        // Predicated region
        $region45: #{encoder_forward.1} parent=11 // pred_check
          %p381 = pneg %p242
        $region46: #{encoder_forward.1} parent=11 // pred_check_branch
          %383 = sbr.rel (%p381) target = $region48
        $region47: #{encoder_forward.1} parent=11 // pred_region
          %s385 = ssub.s32 16, 16
          %386 = vsyncadd [#allocation23], %s385
          %s388 = sshll.u32 [#allocation22], 4
          %s389 = int_to_ptr.vmem [resolvable:$true] %s388
          %391 = dma.hbm_to_vmem [thread:$0]  %s9, 16, %s389, [#allocation23]
        $region48: #{encoder_forward.1} parent=11 // pred_fallthru
          _
      $region12: #{encoder_forward.1} parent=5 // pred_fallthru
        _
      %p392 = scmp.lt.s32.totalorder %s27, 3
      // Predicated region
      $region49: #{encoder_forward.1} parent=5 // pred_check
        %p393 = pneg %p392
      $region50: #{encoder_forward.1} parent=5 // pred_check_branch
        %395 = sbr.rel (%p393) target = $region52
      $region51: #{encoder_forward.1} parent=5 // pred_region
        // Predicated region
        $region53: #{encoder_forward.1} parent=51 // pred_check
          %p396 = pneg %p47
        $region54: #{encoder_forward.1} parent=51 // pred_check_branch
          %398 = sbr.rel (%p396) target = $region56
        $region55: #{encoder_forward.1} parent=51 // pred_region
          %s399 = sand.u32 %s37, 1
          %s400 = scalar_lea.sflag [#allocation8], %s399
          %s401 = sand.u32 %s37, 1
          %s402 = smul.addr %s401, 24
          %s403 = scalar_lea.vmem [#allocation7], %s402
          %s404 = smul.u32 3, %s27
          %s406 = ssub.s32 384, 384
          %407 = vsyncadd %s400, %s406
          %s408 = smul.addr %s404, 128
          %s409 = scalar_lea.hbm %s0, %s408
          %s410 = sshll.u32 %s403, 4
          %s411 = int_to_ptr.vmem [resolvable:$true] %s410
          %416 = dma.hbm_to_vmem [thread:$0]  %s409, 384, %s411, %s400, 128, 128, 8
        $region56: #{encoder_forward.1} parent=51 // pred_fallthru
          _
      $region52: #{encoder_forward.1} parent=5 // pred_fallthru
        _
      %p417 = scmp.le.s32.totalorder 1, %s27
      %p418 = scmp.lt.s32.totalorder %s27, 4
      %p419 = pnand %p417, %p418
      %p420 = pneg %p419
      // Predicated region
      $region57: #{encoder_forward.1} parent=5 // pred_check
        _
      $region58: #{encoder_forward.1} parent=5 // pred_check_branch
        %422 = sbr.rel (%p419) target = $region60
      $region59: #{encoder_forward.1} parent=5 // pred_region
        %s423 = ssub.s32 %s27, 1
        %s424 = sand.u32 %s40, 1
        %s425 = scalar_lea.sflag [#allocation8], %s424
        %s426 = sand.u32 %s40, 1
        %s427 = smul.addr %s426, 24
        %s428 = scalar_lea.vmem [#allocation7], %s427
        // Predicated region
        $region61: #{encoder_forward.1} parent=59 // pred_check
          %p429 = pneg %p53
        $region62: #{encoder_forward.1} parent=59 // pred_check_branch
          %431 = sbr.rel (%p429) target = $region64
        $region63: #{encoder_forward.1} parent=59 // pred_region
          %432 = dma.done %s425, 384
        $region64: #{encoder_forward.1} parent=59 // pred_fallthru
          _
        // Predicated region
        $region65: #{encoder_forward.1} parent=59 // pred_check
          %p433 = pneg %p74
        $region66: #{encoder_forward.1} parent=59 // pred_check_branch
          %435 = sbr.rel (%p433) target = $region68
        $region67: #{encoder_forward.1} parent=59 // pred_region
          %436 = dma.done [#allocation11], 128
        $region68: #{encoder_forward.1} parent=59 // pred_fallthru
          _
        // Predicated region
        $region69: #{encoder_forward.1} parent=59 // pred_check
          %p437 = pneg %p95
        $region70: #{encoder_forward.1} parent=59 // pred_check_branch
          %439 = sbr.rel (%p437) target = $region72
        $region71: #{encoder_forward.1} parent=59 // pred_region
          %440 = dma.done [#allocation11], 512
        $region72: #{encoder_forward.1} parent=59 // pred_fallthru
          _
        // Predicated region
        $region73: #{encoder_forward.1} parent=59 // pred_check
          %p441 = pneg %p116
        $region74: #{encoder_forward.1} parent=59 // pred_check_branch
          %443 = sbr.rel (%p441) target = $region76
        $region75: #{encoder_forward.1} parent=59 // pred_region
          %444 = dma.done [#allocation14], 512
        $region76: #{encoder_forward.1} parent=59 // pred_fallthru
          _
        // Predicated region
        $region77: #{encoder_forward.1} parent=59 // pred_check
          %p445 = pneg %p137
        $region78: #{encoder_forward.1} parent=59 // pred_check_branch
          %447 = sbr.rel (%p445) target = $region80
        $region79: #{encoder_forward.1} parent=59 // pred_region
          %448 = dma.done [#allocation14], 512
        $region80: #{encoder_forward.1} parent=59 // pred_fallthru
          _
        // Predicated region
        $region81: #{encoder_forward.1} parent=59 // pred_check
          %p449 = pneg %p158
        $region82: #{encoder_forward.1} parent=59 // pred_check_branch
          %451 = sbr.rel (%p449) target = $region84
        $region83: #{encoder_forward.1} parent=59 // pred_region
          %452 = dma.done [#allocation17], 16
        $region84: #{encoder_forward.1} parent=59 // pred_fallthru
          _
        // Predicated region
        $region85: #{encoder_forward.1} parent=59 // pred_check
          %p453 = pneg %p179
        $region86: #{encoder_forward.1} parent=59 // pred_check_branch
          %455 = sbr.rel (%p453) target = $region88
        $region87: #{encoder_forward.1} parent=59 // pred_region
          %456 = dma.done [#allocation17], 512
        $region88: #{encoder_forward.1} parent=59 // pred_fallthru
          _
        // Predicated region
        $region89: #{encoder_forward.1} parent=59 // pred_check
          %p457 = pneg %p200
        $region90: #{encoder_forward.1} parent=59 // pred_check_branch
          %459 = sbr.rel (%p457) target = $region92
        $region91: #{encoder_forward.1} parent=59 // pred_region
          %460 = dma.done [#allocation20], 16
        $region92: #{encoder_forward.1} parent=59 // pred_fallthru
          _
        // Predicated region
        $region93: #{encoder_forward.1} parent=59 // pred_check
          %p461 = pneg %p221
        $region94: #{encoder_forward.1} parent=59 // pred_check_branch
          %463 = sbr.rel (%p461) target = $region96
        $region95: #{encoder_forward.1} parent=59 // pred_region
          %464 = dma.done [#allocation20], 512
        $region96: #{encoder_forward.1} parent=59 // pred_fallthru
          _
        // Predicated region
        $region97: #{encoder_forward.1} parent=59 // pred_check
          %p465 = pneg %p242
        $region98: #{encoder_forward.1} parent=59 // pred_check_branch
          %467 = sbr.rel (%p465) target = $region100
        $region99: #{encoder_forward.1} parent=59 // pred_region
          %468 = dma.done [#allocation23], 16
        $region100: #{encoder_forward.1} parent=59 // pred_fallthru
          _
        %s469 = sand.u32 %s40, 1
        %s470 = scalar_lea.sflag [#allocation8], %s469
        %s471 = sand.u32 %s40, 1
        %s472 = smul.addr %s471, 24
        %s473 = scalar_lea.vmem [#allocation7], %s472
        %p474 = pneg %p53
        %p475 = pneg %p50
        %p476 = pneg %p74
        %p477 = pneg %p71
        %p478 = pneg %p95
        %p479 = pneg %p92
        %p480 = pneg %p116
        %p481 = pneg %p113
        %p482 = pneg %p137
        %p483 = pneg %p134
        %p484 = pneg %p158
        %p485 = pneg %p155
        %p486 = pneg %p179
        %p487 = pneg %p176
        %p488 = pneg %p200
        %p489 = pneg %p197
        %p490 = pneg %p221
        %p491 = pneg %p218
        %p492 = pneg %p242
        %p493 = pneg %p239
        %p494 = pneg %p268
        %p495 = pneg %p265
        %s496 = sand.u32 %s255, 1
        %s497 = scalar_lea.sflag [#allocation9], %s496
        %s498 = sand.u32 %s255, 1
        %s499 = smul.addr %s498, 24
        %s500 = scalar_lea.vmem [#allocation24], %s499
        %s501 = smul.u32 3, %s32
        %s502 = smul.u32 3, %s32
        %p503 = scmp.eq.s32.totalorder %s32, 0
        // Predicated region
        $region101: #{encoder_forward.1} parent=59 // pred_check
          %p504 = pneg %p503
        $region102: #{encoder_forward.1} parent=59 // pred_check_branch
          %506 = sbr.rel (%p504) target = $region104
        $region103: #{encoder_forward.1} parent=59 // pred_region
          %vm507 = vcmask 261120
          %508 = vst.msk [vmem:[#allocation2] sm:$0xff] %vm507, 0.0
          %509 = vst.msk [vmem:[#allocation3] sm:$0xff] %vm507, 0.0
          %510 = vst.msk [vmem:[#allocation4] sm:$0xff] %vm507, 0.0
          %511 = vst.msk [vmem:[#allocation5] sm:$0xff] %vm507, 0.0
        $region104: #{encoder_forward.1} parent=59 // pred_fallthru
          _
        %v512 = vld [vmem:[#allocation12] sm:$0xff]
        %v513 = vld [vmem:[#allocation12 + $0x8] sm:$0xff]
        %v514 = vld [vmem:[#allocation12 + $0x10] sm:$0xff]
        %v515 = vld [vmem:[#allocation12 + $0x18] sm:$0xff]
        %v516 = vld [vmem:[#allocation13] sm:$0xff]
        %v517 = vld [vmem:[#allocation13 + $0x8] sm:$0xff]
        %v518 = vld [vmem:[#allocation13 + $0x10] sm:$0xff]
        %v519 = vld [vmem:[#allocation13 + $0x18] sm:$0xff]
        %v520 = vld [vmem:[#allocation15] sm:$0xff]
        %v521 = vld [vmem:[#allocation15 + $0x8] sm:$0xff]
        %v522 = vld [vmem:[#allocation15 + $0x10] sm:$0xff]
        %v523 = vld [vmem:[#allocation15 + $0x18] sm:$0xff]
        %v524 = vld [vmem:[#allocation16] sm:$0x1]
        %v525 = vld [vmem:[#allocation10] sm:$0xff]
        %s526 = smul.u32 %s32, 3
        %v527 = vld [vmem:[#allocation2] sm:$0xff]
        %v528 = vld [vmem:[#allocation3] sm:$0xff]
        %v529 = vld [vmem:[#allocation4] sm:$0xff]
        %v530 = vld [vmem:[#allocation5] sm:$0xff]
        %v531 = vld [vmem:[%s428] sm:$0xff]
        %vm532 = vcmask 261120
        %v534 = vsel %vm532, %v527, 0
        %536 = vmatprep.subr.mxu0 0.0
        %537 = vmatpush1.msra.mxu0 %v512
        %538 = vmatprep.subr.mxu0 0.0
        %539 = vmatpush1.msra.mxu0 %v513
        %540 = vmatprep.subr.mxu0 0.0
        %541 = vmatpush1.msra.mxu0 %v514
        %542 = vmatprep.subr.mxu0 0.0
        %543 = vmatpush1.msra.mxu0 %v515
        %544 = vmatprep.subr.mxu0 0.0
        %545 = vmatpush1.msra.mxu0 0.0
        %546 = vmatprep.subr.mxu0 0.0
        %547 = vmatpush1.msra.mxu0 0.0
        %548 = vmatprep.subr.mxu0 0.0
        %549 = vmatpush1.msra.mxu0 0.0
        %550 = vmatprep.subr.mxu0 0.0
        %551 = vmatpush1.msra.mxu0 0.0
        %552 = vmatprep.subr.mxu0 0.0
        %553 = vmatpush1.msra.mxu0 0.0
        %554 = vmatprep.subr.mxu0 0.0
        %555 = vmatpush1.msra.mxu0 0.0
        %556 = vmatprep.subr.mxu0 0.0
        %557 = vmatpush1.msra.mxu0 0.0
        %558 = vmatprep.subr.mxu0 0.0
        %559 = vmatpush1.msra.mxu0 0.0
        %560 = vmatprep.subr.mxu0 0.0
        %561 = vmatpush1.msra.mxu0 0.0
        %562 = vmatprep.subr.mxu0 0.0
        %563 = vmatpush1.msra.mxu0 0.0
        %564 = vmatprep.subr.mxu0 0.0
        %565 = vmatpush1.msra.mxu0 0.0
        %566 = vmatprep.subr.mxu0 0.0
        %567 = vmatpush1.msra.mxu0 0.0
        %568 = vmatprep.subr.mxu0 0.0
        %569 = vmatpush1.msra.mxu0 0.0
        %570 = vmatprep.subr.mxu0 0.0
        %571 = vmatpush1.msra.mxu0 0.0
        %572 = vmatprep.subr.mxu0 0.0
        %573 = vmatpush1.msra.mxu0 0.0
        %574 = vmatprep.subr.mxu0 0.0
        %575 = vmatpush1.msra.mxu0 0.0
        %576 = vmatprep.subr.mxu0 0.0
        %577 = vmatpush1.msra.mxu0 0.0
        %578 = vmatprep.subr.mxu0 0.0
        %579 = vmatpush1.msra.mxu0 0.0
        %580 = vmatprep.subr.mxu0 0.0
        %581 = vmatpush1.msra.mxu0 0.0
        %582 = vmatprep.subr.mxu0 0.0
        %583 = vmatpush1.msra.mxu0 0.0
        %584 = vmatprep.subr.mxu0 0.0
        %585 = vmatpush1.msra.mxu0 0.0
        %586 = vmatprep.subr.mxu0 0.0
        %587 = vmatpush1.msra.mxu0 0.0
        %588 = vmatprep.subr.mxu0 0.0
        %589 = vmatpush1.msra.mxu0 0.0
        %590 = vmatprep.subr.mxu0 0.0
        %591 = vmatpush1.msra.mxu0 0.0
        %592 = vmatprep.subr.mxu0 0.0
        %593 = vmatpush1.msra.mxu0 0.0
        %594 = vmatprep.subr.mxu0 0.0
        %595 = vmatpush1.msra.mxu0 0.0
        %596 = vmatprep.subr.mxu0 0.0
        %597 = vmatpush1.msra.mxu0 0.0
        %598 = vmatprep.subr.mxu0 0.0
        %599 = vmatpush1.msra.mxu0 0.0
        %600 = vmatprep.mubr.f32.mxu0 0.0
        %601 = vmatmul.mubr.f32.gmra.mrb[0].mxu0 %v534
        %v602 = vpop.f32.mrb[0].mxu0
        %v603 = vadd.f32 0.0, %v602
        %v604 = vpop.f32.mrb[0].mxu0
        %605 = vdwg.mxu0
        %v606 = vadd.f32 %v531, %v603
        %v607 = vxor.u32 %v606, 2147483648
        %v608 = vmul.f32 %v607, 1.442695
        %v609 = vpow.pop %v608
        %v610 = vadd.f32 %v609, 1.0
        %v611 = vrcp.pop %v610
        %v612 = vmul.f32 1.0, %v611
        %v613 = vtanh.pop %v606
        %615 = vrot.lane.b32.xlu0 %v528, 32
        %v616 = vpop.permute.xlu0 %615
        %v618 = vmul.f32 %v612, %v616
        %620 = vrot.lane.b32.xlu0 %v613, 32
        %v621 = vpop.permute.xlu0 %620
        %v623 = vmul.f32 %v612, %v621
        %625 = vrot.lane.b32.xlu0 %v623, 32
        %v626 = vpop.permute.xlu0 %625
        %v628 = vadd.f32 %v618, %v626
        %v629 = vtanh.pop %v628
        %631 = vrot.lane.b32.xlu0 %v629, 32
        %v632 = vpop.permute.xlu0 %631
        %v634 = vmul.f32 %v612, %v632
        %v636 = vsel %vm532, %v529, 0
        %638 = vmatprep.subr.mxu0 0.0
        %639 = vmatpush1.msra.mxu0 %v520
        %640 = vmatprep.subr.mxu0 0.0
        %641 = vmatpush1.msra.mxu0 %v521
        %642 = vmatprep.subr.mxu0 0.0
        %643 = vmatpush1.msra.mxu0 %v522
        %644 = vmatprep.subr.mxu0 0.0
        %645 = vmatpush1.msra.mxu0 %v523
        %646 = vmatprep.subr.mxu0 0.0
        %647 = vmatpush1.msra.mxu0 0.0
        %648 = vmatprep.subr.mxu0 0.0
        %649 = vmatpush1.msra.mxu0 0.0
        %650 = vmatprep.subr.mxu0 0.0
        %651 = vmatpush1.msra.mxu0 0.0
        %652 = vmatprep.subr.mxu0 0.0
        %653 = vmatpush1.msra.mxu0 0.0
        %654 = vmatprep.subr.mxu0 0.0
        %655 = vmatpush1.msra.mxu0 0.0
        %656 = vmatprep.subr.mxu0 0.0
        %657 = vmatpush1.msra.mxu0 0.0
        %658 = vmatprep.subr.mxu0 0.0
        %659 = vmatpush1.msra.mxu0 0.0
        %660 = vmatprep.subr.mxu0 0.0
        %661 = vmatpush1.msra.mxu0 0.0
        %662 = vmatprep.subr.mxu0 0.0
        %663 = vmatpush1.msra.mxu0 0.0
        %664 = vmatprep.subr.mxu0 0.0
        %665 = vmatpush1.msra.mxu0 0.0
        %666 = vmatprep.subr.mxu0 0.0
        %667 = vmatpush1.msra.mxu0 0.0
        %668 = vmatprep.subr.mxu0 0.0
        %669 = vmatpush1.msra.mxu0 0.0
        %670 = vmatprep.subr.mxu0 0.0
        %671 = vmatpush1.msra.mxu0 0.0
        %672 = vmatprep.subr.mxu0 0.0
        %673 = vmatpush1.msra.mxu0 0.0
        %674 = vmatprep.subr.mxu0 0.0
        %675 = vmatpush1.msra.mxu0 0.0
        %676 = vmatprep.subr.mxu0 0.0
        %677 = vmatpush1.msra.mxu0 0.0
        %678 = vmatprep.subr.mxu0 0.0
        %679 = vmatpush1.msra.mxu0 0.0
        %680 = vmatprep.subr.mxu0 0.0
        %681 = vmatpush1.msra.mxu0 0.0
        %682 = vmatprep.subr.mxu0 0.0
        %683 = vmatpush1.msra.mxu0 0.0
        %684 = vmatprep.subr.mxu0 0.0
        %685 = vmatpush1.msra.mxu0 0.0
        %686 = vmatprep.subr.mxu0 0.0
        %687 = vmatpush1.msra.mxu0 0.0
        %688 = vmatprep.subr.mxu0 0.0
        %689 = vmatpush1.msra.mxu0 0.0
        %690 = vmatprep.subr.mxu0 0.0
        %691 = vmatpush1.msra.mxu0 0.0
        %692 = vmatprep.subr.mxu0 0.0
        %693 = vmatpush1.msra.mxu0 0.0
        %694 = vmatprep.subr.mxu0 0.0
        %695 = vmatpush1.msra.mxu0 0.0
        %696 = vmatprep.subr.mxu0 0.0
        %697 = vmatpush1.msra.mxu0 0.0
        %698 = vmatprep.subr.mxu0 0.0
        %699 = vmatpush1.msra.mxu0 0.0
        %700 = vmatprep.subr.mxu0 0.0
        %701 = vmatpush1.msra.mxu0 0.0
        %702 = vmatprep.mubr.f32.mxu0 0.0
        %703 = vmatmul.mubr.f32.gmra.mrb[0].mxu0 %v636
        %v704 = vpop.f32.mrb[0].mxu0
        %v705 = vadd.f32 0.0, %v704
        %v706 = vpop.f32.mrb[0].mxu0
        %707 = vdwg.mxu0
        %709 = vrot.lane.b32.xlu0 %v634, 64
        %v710 = vpop.permute.xlu0 %709
        %v711 = vsel %vm532, %v710, 0
        %713 = vmatprep.subr.mxu0 0.0
        %714 = vmatpush1.msra.mxu0 %v516
        %715 = vmatprep.subr.mxu0 0.0
        %716 = vmatpush1.msra.mxu0 %v517
        %717 = vmatprep.subr.mxu0 0.0
        %718 = vmatpush1.msra.mxu0 %v518
        %719 = vmatprep.subr.mxu0 0.0
        %720 = vmatpush1.msra.mxu0 %v519
        %721 = vmatprep.subr.mxu0 0.0
        %722 = vmatpush1.msra.mxu0 0.0
        %723 = vmatprep.subr.mxu0 0.0
        %724 = vmatpush1.msra.mxu0 0.0
        %725 = vmatprep.subr.mxu0 0.0
        %726 = vmatpush1.msra.mxu0 0.0
        %727 = vmatprep.subr.mxu0 0.0
        %728 = vmatpush1.msra.mxu0 0.0
        %729 = vmatprep.subr.mxu0 0.0
        %730 = vmatpush1.msra.mxu0 0.0
        %731 = vmatprep.subr.mxu0 0.0
        %732 = vmatpush1.msra.mxu0 0.0
        %733 = vmatprep.subr.mxu0 0.0
        %734 = vmatpush1.msra.mxu0 0.0
        %735 = vmatprep.subr.mxu0 0.0
        %736 = vmatpush1.msra.mxu0 0.0
        %737 = vmatprep.subr.mxu0 0.0
        %738 = vmatpush1.msra.mxu0 0.0
        %739 = vmatprep.subr.mxu0 0.0
        %740 = vmatpush1.msra.mxu0 0.0
        %741 = vmatprep.subr.mxu0 0.0
        %742 = vmatpush1.msra.mxu0 0.0
        %743 = vmatprep.subr.mxu0 0.0
        %744 = vmatpush1.msra.mxu0 0.0
        %745 = vmatprep.subr.mxu0 0.0
        %746 = vmatpush1.msra.mxu0 0.0
        %747 = vmatprep.subr.mxu0 0.0
        %748 = vmatpush1.msra.mxu0 0.0
        %749 = vmatprep.subr.mxu0 0.0
        %750 = vmatpush1.msra.mxu0 0.0
        %751 = vmatprep.subr.mxu0 0.0
        %752 = vmatpush1.msra.mxu0 0.0
        %753 = vmatprep.subr.mxu0 0.0
        %754 = vmatpush1.msra.mxu0 0.0
        %755 = vmatprep.subr.mxu0 0.0
        %756 = vmatpush1.msra.mxu0 0.0
        %757 = vmatprep.subr.mxu0 0.0
        %758 = vmatpush1.msra.mxu0 0.0
        %759 = vmatprep.subr.mxu0 0.0
        %760 = vmatpush1.msra.mxu0 0.0
        %761 = vmatprep.subr.mxu0 0.0
        %762 = vmatpush1.msra.mxu0 0.0
        %763 = vmatprep.subr.mxu0 0.0
        %764 = vmatpush1.msra.mxu0 0.0
        %765 = vmatprep.subr.mxu0 0.0
        %766 = vmatpush1.msra.mxu0 0.0
        %767 = vmatprep.subr.mxu0 0.0
        %768 = vmatpush1.msra.mxu0 0.0
        %769 = vmatprep.subr.mxu0 0.0
        %770 = vmatpush1.msra.mxu0 0.0
        %771 = vmatprep.subr.mxu0 0.0
        %772 = vmatpush1.msra.mxu0 0.0
        %773 = vmatprep.subr.mxu0 0.0
        %774 = vmatpush1.msra.mxu0 0.0
        %775 = vmatprep.subr.mxu0 0.0
        %776 = vmatpush1.msra.mxu0 0.0
        %777 = vmatprep.mubr.f32.mxu0 0.0
        %778 = vmatmul.mubr.f32.gmra.mrb[0].mxu0 %v711
        %v779 = vpop.f32.mrb[0].mxu0
        %v780 = vadd.f32 %v705, %v779
        %v781 = vpop.f32.mrb[0].mxu0
        %782 = vdwg.mxu0
        %v784 = vlaneseq
        %v785 = vshrl.u32 %v784, 7
        %v786 = vsub.s32 0, %v785
        %v787 = vrot.slane %v524, %v786
        %v789 = vadd.f32 %v780, %v787
        %v790 = vxor.u32 %v789, 2147483648
        %v791 = vmul.f32 %v790, 1.442695
        %v792 = vpow.pop %v791
        %v793 = vadd.f32 %v792, 1.0
        %v794 = vrcp.pop %v793
        %v795 = vmul.f32 1.0, %v794
        %v796 = vtanh.pop %v789
        %798 = vrot.lane.b32.xlu0 %v530, 32
        %v799 = vpop.permute.xlu0 %798
        %v801 = vmul.f32 %v795, %v799
        %803 = vrot.lane.b32.xlu0 %v796, 32
        %v804 = vpop.permute.xlu0 %803
        %v806 = vmul.f32 %v795, %v804
        %808 = vrot.lane.b32.xlu0 %v806, 32
        %v809 = vpop.permute.xlu0 %808
        %v811 = vadd.f32 %v801, %v809
        %v812 = vtanh.pop %v811
        %814 = vrot.lane.b32.xlu0 %v812, 32
        %v815 = vpop.permute.xlu0 %814
        %v817 = vmul.f32 %v795, %v815
        %v818 = vstv %s526
        %vm819 = vcmp.lt.s32.totalorder %v818, %v525
        %v820 = vsel %vm819, 1, 0
        %821 = vset.pattern.permute.xlu0 0
        %822 = vperm.xlu0 %821, %v820
        %v823 = vpop.permute.xlu0 %822
        %vm824 = vcmp.eq.s32.totalorder %v823, 1
        %v825 = vsel %vm824, %v817, 0.0
        %827 = vrot.lane.b32.xlu0 %v825, 64
        %v828 = vpop.permute.xlu0 %827
        %830 = vst.msk [vmem:[#allocation6] sm:$0xff] %vm532, %v828
        %s831 = scalar_lea.vmem %s428, 8 [#allocation7]
        %v832 = vld [vmem:[%s831] sm:$0xff]
        %833 = vmatprep.subr.mxu0 0.0
        %834 = vmatpush1.msra.mxu0 %v512
        %835 = vmatprep.subr.mxu0 0.0
        %836 = vmatpush1.msra.mxu0 %v513
        %837 = vmatprep.subr.mxu0 0.0
        %838 = vmatpush1.msra.mxu0 %v514
        %839 = vmatprep.subr.mxu0 0.0
        %840 = vmatpush1.msra.mxu0 %v515
        %841 = vmatprep.subr.mxu0 0.0
        %842 = vmatpush1.msra.mxu0 0.0
        %843 = vmatprep.subr.mxu0 0.0
        %844 = vmatpush1.msra.mxu0 0.0
        %845 = vmatprep.subr.mxu0 0.0
        %846 = vmatpush1.msra.mxu0 0.0
        %847 = vmatprep.subr.mxu0 0.0
        %848 = vmatpush1.msra.mxu0 0.0
        %849 = vmatprep.subr.mxu0 0.0
        %850 = vmatpush1.msra.mxu0 0.0
        %851 = vmatprep.subr.mxu0 0.0
        %852 = vmatpush1.msra.mxu0 0.0
        %853 = vmatprep.subr.mxu0 0.0
        %854 = vmatpush1.msra.mxu0 0.0
        %855 = vmatprep.subr.mxu0 0.0
        %856 = vmatpush1.msra.mxu0 0.0
        %857 = vmatprep.subr.mxu0 0.0
        %858 = vmatpush1.msra.mxu0 0.0
        %859 = vmatprep.subr.mxu0 0.0
        %860 = vmatpush1.msra.mxu0 0.0
        %861 = vmatprep.subr.mxu0 0.0
        %862 = vmatpush1.msra.mxu0 0.0
        %863 = vmatprep.subr.mxu0 0.0
        %864 = vmatpush1.msra.mxu0 0.0
        %865 = vmatprep.subr.mxu0 0.0
        %866 = vmatpush1.msra.mxu0 0.0
        %867 = vmatprep.subr.mxu0 0.0
        %868 = vmatpush1.msra.mxu0 0.0
        %869 = vmatprep.subr.mxu0 0.0
        %870 = vmatpush1.msra.mxu0 0.0
        %871 = vmatprep.subr.mxu0 0.0
        %872 = vmatpush1.msra.mxu0 0.0
        %873 = vmatprep.subr.mxu0 0.0
        %874 = vmatpush1.msra.mxu0 0.0
        %875 = vmatprep.subr.mxu0 0.0
        %876 = vmatpush1.msra.mxu0 0.0
        %877 = vmatprep.subr.mxu0 0.0
        %878 = vmatpush1.msra.mxu0 0.0
        %879 = vmatprep.subr.mxu0 0.0
        %880 = vmatpush1.msra.mxu0 0.0
        %881 = vmatprep.subr.mxu0 0.0
        %882 = vmatpush1.msra.mxu0 0.0
        %883 = vmatprep.subr.mxu0 0.0
        %884 = vmatpush1.msra.mxu0 0.0
        %885 = vmatprep.subr.mxu0 0.0
        %886 = vmatpush1.msra.mxu0 0.0
        %887 = vmatprep.subr.mxu0 0.0
        %888 = vmatpush1.msra.mxu0 0.0
        %889 = vmatprep.subr.mxu0 0.0
        %890 = vmatpush1.msra.mxu0 0.0
        %891 = vmatprep.subr.mxu0 0.0
        %892 = vmatpush1.msra.mxu0 0.0
        %893 = vmatprep.subr.mxu0 0.0
        %894 = vmatpush1.msra.mxu0 0.0
        %895 = vmatprep.subr.mxu0 0.0
        %896 = vmatpush1.msra.mxu0 0.0
        %897 = vmatprep.mubr.f32.mxu0 0.0
        %898 = vmatmul.mubr.f32.gmra.mrb[0].mxu0 %v711
        %v899 = vpop.f32.mrb[0].mxu0
        %v900 = vadd.f32 0.0, %v899
        %v901 = vpop.f32.mrb[0].mxu0
        %902 = vdwg.mxu0
        %v903 = vadd.f32 %v832, %v900
        %v904 = vxor.u32 %v903, 2147483648
        %v905 = vmul.f32 %v904, 1.442695
        %v906 = vpow.pop %v905
        %v907 = vadd.f32 %v906, 1.0
        %v908 = vrcp.pop %v907
        %v909 = vmul.f32 1.0, %v908
        %v910 = vtanh.pop %v903
        %v911 = vmul.f32 %v909, %v628
        %913 = vrot.lane.b32.xlu0 %v910, 32
        %v914 = vpop.permute.xlu0 %913
        %v916 = vmul.f32 %v909, %v914
        %918 = vrot.lane.b32.xlu0 %v916, 32
        %v919 = vpop.permute.xlu0 %918
        %v921 = vadd.f32 %v911, %v919
        %v922 = vtanh.pop %v921
        %924 = vrot.lane.b32.xlu0 %v922, 32
        %v925 = vpop.permute.xlu0 %924
        %v927 = vmul.f32 %v909, %v925
        %929 = vrot.lane.b32.xlu0 %v817, 64
        %v930 = vpop.permute.xlu0 %929
        %v931 = vsel %vm532, %v930, 0
        %933 = vmatprep.subr.mxu0 0.0
        %934 = vmatpush1.msra.mxu0 %v520
        %935 = vmatprep.subr.mxu0 0.0
        %936 = vmatpush1.msra.mxu0 %v521
        %937 = vmatprep.subr.mxu0 0.0
        %938 = vmatpush1.msra.mxu0 %v522
        %939 = vmatprep.subr.mxu0 0.0
        %940 = vmatpush1.msra.mxu0 %v523
        %941 = vmatprep.subr.mxu0 0.0
        %942 = vmatpush1.msra.mxu0 0.0
        %943 = vmatprep.subr.mxu0 0.0
        %944 = vmatpush1.msra.mxu0 0.0
        %945 = vmatprep.subr.mxu0 0.0
        %946 = vmatpush1.msra.mxu0 0.0
        %947 = vmatprep.subr.mxu0 0.0
        %948 = vmatpush1.msra.mxu0 0.0
        %949 = vmatprep.subr.mxu0 0.0
        %950 = vmatpush1.msra.mxu0 0.0
        %951 = vmatprep.subr.mxu0 0.0
        %952 = vmatpush1.msra.mxu0 0.0
        %953 = vmatprep.subr.mxu0 0.0
        %954 = vmatpush1.msra.mxu0 0.0
        %955 = vmatprep.subr.mxu0 0.0
        %956 = vmatpush1.msra.mxu0 0.0
        %957 = vmatprep.subr.mxu0 0.0
        %958 = vmatpush1.msra.mxu0 0.0
        %959 = vmatprep.subr.mxu0 0.0
        %960 = vmatpush1.msra.mxu0 0.0
        %961 = vmatprep.subr.mxu0 0.0
        %962 = vmatpush1.msra.mxu0 0.0
        %963 = vmatprep.subr.mxu0 0.0
        %964 = vmatpush1.msra.mxu0 0.0
        %965 = vmatprep.subr.mxu0 0.0
        %966 = vmatpush1.msra.mxu0 0.0
        %967 = vmatprep.subr.mxu0 0.0
        %968 = vmatpush1.msra.mxu0 0.0
        %969 = vmatprep.subr.mxu0 0.0
        %970 = vmatpush1.msra.mxu0 0.0
        %971 = vmatprep.subr.mxu0 0.0
        %972 = vmatpush1.msra.mxu0 0.0
        %973 = vmatprep.subr.mxu0 0.0
        %974 = vmatpush1.msra.mxu0 0.0
        %975 = vmatprep.subr.mxu0 0.0
        %976 = vmatpush1.msra.mxu0 0.0
        %977 = vmatprep.subr.mxu0 0.0
        %978 = vmatpush1.msra.mxu0 0.0
        %979 = vmatprep.subr.mxu0 0.0
        %980 = vmatpush1.msra.mxu0 0.0
        %981 = vmatprep.subr.mxu0 0.0
        %982 = vmatpush1.msra.mxu0 0.0
        %983 = vmatprep.subr.mxu0 0.0
        %984 = vmatpush1.msra.mxu0 0.0
        %985 = vmatprep.subr.mxu0 0.0
        %986 = vmatpush1.msra.mxu0 0.0
        %987 = vmatprep.subr.mxu0 0.0
        %988 = vmatpush1.msra.mxu0 0.0
        %989 = vmatprep.subr.mxu0 0.0
        %990 = vmatpush1.msra.mxu0 0.0
        %991 = vmatprep.subr.mxu0 0.0
        %992 = vmatpush1.msra.mxu0 0.0
        %993 = vmatprep.subr.mxu0 0.0
        %994 = vmatpush1.msra.mxu0 0.0
        %995 = vmatprep.subr.mxu0 0.0
        %996 = vmatpush1.msra.mxu0 0.0
        %997 = vmatprep.mubr.f32.mxu0 0.0
        %998 = vmatmul.mubr.f32.gmra.mrb[0].mxu0 %v931
        %v999 = vpop.f32.mrb[0].mxu0
        %v1000 = vadd.f32 0.0, %v999
        %v1001 = vpop.f32.mrb[0].mxu0
        %1002 = vdwg.mxu0
        %1004 = vrot.lane.b32.xlu0 %v927, 64
        %v1005 = vpop.permute.xlu0 %1004
        %v1006 = vsel %vm532, %v1005, 0
        %1008 = vmatprep.subr.mxu0 0.0
        %1009 = vmatpush1.msra.mxu0 %v516
        %1010 = vmatprep.subr.mxu0 0.0
        %1011 = vmatpush1.msra.mxu0 %v517
        %1012 = vmatprep.subr.mxu0 0.0
        %1013 = vmatpush1.msra.mxu0 %v518
        %1014 = vmatprep.subr.mxu0 0.0
        %1015 = vmatpush1.msra.mxu0 %v519
        %1016 = vmatprep.subr.mxu0 0.0
        %1017 = vmatpush1.msra.mxu0 0.0
        %1018 = vmatprep.subr.mxu0 0.0
        %1019 = vmatpush1.msra.mxu0 0.0
        %1020 = vmatprep.subr.mxu0 0.0
        %1021 = vmatpush1.msra.mxu0 0.0
        %1022 = vmatprep.subr.mxu0 0.0
        %1023 = vmatpush1.msra.mxu0 0.0
        %1024 = vmatprep.subr.mxu0 0.0
        %1025 = vmatpush1.msra.mxu0 0.0
        %1026 = vmatprep.subr.mxu0 0.0
        %1027 = vmatpush1.msra.mxu0 0.0
        %1028 = vmatprep.subr.mxu0 0.0
        %1029 = vmatpush1.msra.mxu0 0.0
        %1030 = vmatprep.subr.mxu0 0.0
        %1031 = vmatpush1.msra.mxu0 0.0
        %1032 = vmatprep.subr.mxu0 0.0
        %1033 = vmatpush1.msra.mxu0 0.0
        %1034 = vmatprep.subr.mxu0 0.0
        %1035 = vmatpush1.msra.mxu0 0.0
        %1036 = vmatprep.subr.mxu0 0.0
        %1037 = vmatpush1.msra.mxu0 0.0
        %1038 = vmatprep.subr.mxu0 0.0
        %1039 = vmatpush1.msra.mxu0 0.0
        %1040 = vmatprep.subr.mxu0 0.0
        %1041 = vmatpush1.msra.mxu0 0.0
        %1042 = vmatprep.subr.mxu0 0.0
        %1043 = vmatpush1.msra.mxu0 0.0
        %1044 = vmatprep.subr.mxu0 0.0
        %1045 = vmatpush1.msra.mxu0 0.0
        %1046 = vmatprep.subr.mxu0 0.0
        %1047 = vmatpush1.msra.mxu0 0.0
        %1048 = vmatprep.subr.mxu0 0.0
        %1049 = vmatpush1.msra.mxu0 0.0
        %1050 = vmatprep.subr.mxu0 0.0
        %1051 = vmatpush1.msra.mxu0 0.0
        %1052 = vmatprep.subr.mxu0 0.0
        %1053 = vmatpush1.msra.mxu0 0.0
        %1054 = vmatprep.subr.mxu0 0.0
        %1055 = vmatpush1.msra.mxu0 0.0
        %1056 = vmatprep.subr.mxu0 0.0
        %1057 = vmatpush1.msra.mxu0 0.0
        %1058 = vmatprep.subr.mxu0 0.0
        %1059 = vmatpush1.msra.mxu0 0.0
        %1060 = vmatprep.subr.mxu0 0.0
        %1061 = vmatpush1.msra.mxu0 0.0
        %1062 = vmatprep.subr.mxu0 0.0
        %1063 = vmatpush1.msra.mxu0 0.0
        %1064 = vmatprep.subr.mxu0 0.0
        %1065 = vmatpush1.msra.mxu0 0.0
        %1066 = vmatprep.subr.mxu0 0.0
        %1067 = vmatpush1.msra.mxu0 0.0
        %1068 = vmatprep.subr.mxu0 0.0
        %1069 = vmatpush1.msra.mxu0 0.0
        %1070 = vmatprep.subr.mxu0 0.0
        %1071 = vmatpush1.msra.mxu0 0.0
        %1072 = vmatprep.mubr.f32.mxu0 0.0
        %1073 = vmatmul.mubr.f32.gmra.mrb[0].mxu0 %v1006
        %v1074 = vpop.f32.mrb[0].mxu0
        %v1075 = vadd.f32 %v1000, %v1074
        %v1076 = vpop.f32.mrb[0].mxu0
        %1077 = vdwg.mxu0
        %v1078 = vadd.f32 %v1075, %v787
        %v1079 = vxor.u32 %v1078, 2147483648
        %v1080 = vmul.f32 %v1079, 1.442695
        %v1081 = vpow.pop %v1080
        %v1082 = vadd.f32 %v1081, 1.0
        %v1083 = vrcp.pop %v1082
        %v1084 = vmul.f32 1.0, %v1083
        %v1085 = vtanh.pop %v1078
        %v1086 = vmul.f32 %v1084, %v811
        %1088 = vrot.lane.b32.xlu0 %v1085, 32
        %v1089 = vpop.permute.xlu0 %1088
        %v1091 = vmul.f32 %v1084, %v1089
        %1093 = vrot.lane.b32.xlu0 %v1091, 32
        %v1094 = vpop.permute.xlu0 %1093
        %v1096 = vadd.f32 %v1086, %v1094
        %v1097 = vtanh.pop %v1096
        %1099 = vrot.lane.b32.xlu0 %v1097, 32
        %v1100 = vpop.permute.xlu0 %1099
        %v1102 = vmul.f32 %v1084, %v1100
        %s1103 = sadd.s32 %s526, 1
        %v1104 = vstv %s1103
        %vm1105 = vcmp.lt.s32.totalorder %v1104, %v525
        %v1106 = vsel %vm1105, 1, 0
        %1107 = vset.pattern.permute.xlu0 0
        %1108 = vperm.xlu0 %1107, %v1106
        %v1109 = vpop.permute.xlu0 %1108
        %vm1110 = vcmp.eq.s32.totalorder %v1109, 1
        %v1111 = vsel %vm1110, %v1102, 0.0
        %1113 = vrot.lane.b32.xlu0 %v1111, 64
        %v1114 = vpop.permute.xlu0 %1113
        %s1116 = scalar_lea.vmem [#allocation6], 8
        %1117 = vst.msk [vmem:[%s1116] sm:$0xff] %vm532, %v1114
        %s1118 = scalar_lea.vmem %s428, 16 [#allocation7]
        %v1119 = vld [vmem:[%s1118] sm:$0xff]
        %1120 = vmatprep.subr.mxu0 0.0
        %1121 = vmatpush1.msra.mxu0 %v512
        %1122 = vmatprep.subr.mxu0 0.0
        %1123 = vmatpush1.msra.mxu0 %v513
        %1124 = vmatprep.subr.mxu0 0.0
        %1125 = vmatpush1.msra.mxu0 %v514
        %1126 = vmatprep.subr.mxu0 0.0
        %1127 = vmatpush1.msra.mxu0 %v515
        %1128 = vmatprep.subr.mxu0 0.0
        %1129 = vmatpush1.msra.mxu0 0.0
        %1130 = vmatprep.subr.mxu0 0.0
        %1131 = vmatpush1.msra.mxu0 0.0
        %1132 = vmatprep.subr.mxu0 0.0
        %1133 = vmatpush1.msra.mxu0 0.0
        %1134 = vmatprep.subr.mxu0 0.0
        %1135 = vmatpush1.msra.mxu0 0.0
        %1136 = vmatprep.subr.mxu0 0.0
        %1137 = vmatpush1.msra.mxu0 0.0
        %1138 = vmatprep.subr.mxu0 0.0
        %1139 = vmatpush1.msra.mxu0 0.0
        %1140 = vmatprep.subr.mxu0 0.0
        %1141 = vmatpush1.msra.mxu0 0.0
        %1142 = vmatprep.subr.mxu0 0.0
        %1143 = vmatpush1.msra.mxu0 0.0
        %1144 = vmatprep.subr.mxu0 0.0
        %1145 = vmatpush1.msra.mxu0 0.0
        %1146 = vmatprep.subr.mxu0 0.0
        %1147 = vmatpush1.msra.mxu0 0.0
        %1148 = vmatprep.subr.mxu0 0.0
        %1149 = vmatpush1.msra.mxu0 0.0
        %1150 = vmatprep.subr.mxu0 0.0
        %1151 = vmatpush1.msra.mxu0 0.0
        %1152 = vmatprep.subr.mxu0 0.0
        %1153 = vmatpush1.msra.mxu0 0.0
        %1154 = vmatprep.subr.mxu0 0.0
        %1155 = vmatpush1.msra.mxu0 0.0
        %1156 = vmatprep.subr.mxu0 0.0
        %1157 = vmatpush1.msra.mxu0 0.0
        %1158 = vmatprep.subr.mxu0 0.0
        %1159 = vmatpush1.msra.mxu0 0.0
        %1160 = vmatprep.subr.mxu0 0.0
        %1161 = vmatpush1.msra.mxu0 0.0
        %1162 = vmatprep.subr.mxu0 0.0
        %1163 = vmatpush1.msra.mxu0 0.0
        %1164 = vmatprep.subr.mxu0 0.0
        %1165 = vmatpush1.msra.mxu0 0.0
        %1166 = vmatprep.subr.mxu0 0.0
        %1167 = vmatpush1.msra.mxu0 0.0
        %1168 = vmatprep.subr.mxu0 0.0
        %1169 = vmatpush1.msra.mxu0 0.0
        %1170 = vmatprep.subr.mxu0 0.0
        %1171 = vmatpush1.msra.mxu0 0.0
        %1172 = vmatprep.subr.mxu0 0.0
        %1173 = vmatpush1.msra.mxu0 0.0
        %1174 = vmatprep.subr.mxu0 0.0
        %1175 = vmatpush1.msra.mxu0 0.0
        %1176 = vmatprep.subr.mxu0 0.0
        %1177 = vmatpush1.msra.mxu0 0.0
        %1178 = vmatprep.subr.mxu0 0.0
        %1179 = vmatpush1.msra.mxu0 0.0
        %1180 = vmatprep.subr.mxu0 0.0
        %1181 = vmatpush1.msra.mxu0 0.0
        %1182 = vmatprep.subr.mxu0 0.0
        %1183 = vmatpush1.msra.mxu0 0.0
        %1184 = vmatprep.mubr.f32.mxu0 0.0
        %1185 = vmatmul.mubr.f32.gmra.mrb[0].mxu0 %v1006
        %v1186 = vpop.f32.mrb[0].mxu0
        %v1187 = vadd.f32 0.0, %v1186
        %v1188 = vpop.f32.mrb[0].mxu0
        %1189 = vdwg.mxu0
        %v1190 = vadd.f32 %v1119, %v1187
        %v1191 = vxor.u32 %v1190, 2147483648
        %v1192 = vmul.f32 %v1191, 1.442695
        %v1193 = vpow.pop %v1192
        %v1194 = vadd.f32 %v1193, 1.0
        %v1195 = vrcp.pop %v1194
        %v1196 = vmul.f32 1.0, %v1195
        %v1197 = vtanh.pop %v1190
        %v1198 = vmul.f32 %v1196, %v921
        %1200 = vrot.lane.b32.xlu0 %v1197, 32
        %v1201 = vpop.permute.xlu0 %1200
        %v1203 = vmul.f32 %v1196, %v1201
        %1205 = vrot.lane.b32.xlu0 %v1203, 32
        %v1206 = vpop.permute.xlu0 %1205
        %v1208 = vadd.f32 %v1198, %v1206
        %v1209 = vtanh.pop %v1208
        %1211 = vrot.lane.b32.xlu0 %v1209, 32
        %v1212 = vpop.permute.xlu0 %1211
        %v1214 = vmul.f32 %v1196, %v1212
        %1216 = vrot.lane.b32.xlu0 %v1102, 64
        %v1217 = vpop.permute.xlu0 %1216
        %v1218 = vsel %vm532, %v1217, 0
        %1220 = vmatprep.subr.mxu0 0.0
        %1221 = vmatpush1.msra.mxu0 %v520
        %1222 = vmatprep.subr.mxu0 0.0
        %1223 = vmatpush1.msra.mxu0 %v521
        %1224 = vmatprep.subr.mxu0 0.0
        %1225 = vmatpush1.msra.mxu0 %v522
        %1226 = vmatprep.subr.mxu0 0.0
        %1227 = vmatpush1.msra.mxu0 %v523
        %1228 = vmatprep.subr.mxu0 0.0
        %1229 = vmatpush1.msra.mxu0 0.0
        %1230 = vmatprep.subr.mxu0 0.0
        %1231 = vmatpush1.msra.mxu0 0.0
        %1232 = vmatprep.subr.mxu0 0.0
        %1233 = vmatpush1.msra.mxu0 0.0
        %1234 = vmatprep.subr.mxu0 0.0
        %1235 = vmatpush1.msra.mxu0 0.0
        %1236 = vmatprep.subr.mxu0 0.0
        %1237 = vmatpush1.msra.mxu0 0.0
        %1238 = vmatprep.subr.mxu0 0.0
        %1239 = vmatpush1.msra.mxu0 0.0
        %1240 = vmatprep.subr.mxu0 0.0
        %1241 = vmatpush1.msra.mxu0 0.0
        %1242 = vmatprep.subr.mxu0 0.0
        %1243 = vmatpush1.msra.mxu0 0.0
        %1244 = vmatprep.subr.mxu0 0.0
        %1245 = vmatpush1.msra.mxu0 0.0
        %1246 = vmatprep.subr.mxu0 0.0
        %1247 = vmatpush1.msra.mxu0 0.0
        %1248 = vmatprep.subr.mxu0 0.0
        %1249 = vmatpush1.msra.mxu0 0.0
        %1250 = vmatprep.subr.mxu0 0.0
        %1251 = vmatpush1.msra.mxu0 0.0
        %1252 = vmatprep.subr.mxu0 0.0
        %1253 = vmatpush1.msra.mxu0 0.0
        %1254 = vmatprep.subr.mxu0 0.0
        %1255 = vmatpush1.msra.mxu0 0.0
        %1256 = vmatprep.subr.mxu0 0.0
        %1257 = vmatpush1.msra.mxu0 0.0
        %1258 = vmatprep.subr.mxu0 0.0
        %1259 = vmatpush1.msra.mxu0 0.0
        %1260 = vmatprep.subr.mxu0 0.0
        %1261 = vmatpush1.msra.mxu0 0.0
        %1262 = vmatprep.subr.mxu0 0.0
        %1263 = vmatpush1.msra.mxu0 0.0
        %1264 = vmatprep.subr.mxu0 0.0
        %1265 = vmatpush1.msra.mxu0 0.0
        %1266 = vmatprep.subr.mxu0 0.0
        %1267 = vmatpush1.msra.mxu0 0.0
        %1268 = vmatprep.subr.mxu0 0.0
        %1269 = vmatpush1.msra.mxu0 0.0
        %1270 = vmatprep.subr.mxu0 0.0
        %1271 = vmatpush1.msra.mxu0 0.0
        %1272 = vmatprep.subr.mxu0 0.0
        %1273 = vmatpush1.msra.mxu0 0.0
        %1274 = vmatprep.subr.mxu0 0.0
        %1275 = vmatpush1.msra.mxu0 0.0
        %1276 = vmatprep.subr.mxu0 0.0
        %1277 = vmatpush1.msra.mxu0 0.0
        %1278 = vmatprep.subr.mxu0 0.0
        %1279 = vmatpush1.msra.mxu0 0.0
        %1280 = vmatprep.subr.mxu0 0.0
        %1281 = vmatpush1.msra.mxu0 0.0
        %1282 = vmatprep.subr.mxu0 0.0
        %1283 = vmatpush1.msra.mxu0 0.0
        %1284 = vmatprep.mubr.f32.mxu0 0.0
        %1285 = vmatmul.mubr.f32.gmra.mrb[0].mxu0 %v1218
        %v1286 = vpop.f32.mrb[0].mxu0
        %v1287 = vadd.f32 0.0, %v1286
        %v1288 = vpop.f32.mrb[0].mxu0
        %1289 = vdwg.mxu0
        %1291 = vrot.lane.b32.xlu0 %v1214, 64
        %v1292 = vpop.permute.xlu0 %1291
        %v1293 = vsel %vm532, %v1292, 0
        %1295 = vmatprep.subr.mxu0 0.0
        %1296 = vmatpush1.msra.mxu0 %v516
        %1297 = vmatprep.subr.mxu0 0.0
        %1298 = vmatpush1.msra.mxu0 %v517
        %1299 = vmatprep.subr.mxu0 0.0
        %1300 = vmatpush1.msra.mxu0 %v518
        %1301 = vmatprep.subr.mxu0 0.0
        %1302 = vmatpush1.msra.mxu0 %v519
        %1303 = vmatprep.subr.mxu0 0.0
        %1304 = vmatpush1.msra.mxu0 0.0
        %1305 = vmatprep.subr.mxu0 0.0
        %1306 = vmatpush1.msra.mxu0 0.0
        %1307 = vmatprep.subr.mxu0 0.0
        %1308 = vmatpush1.msra.mxu0 0.0
        %1309 = vmatprep.subr.mxu0 0.0
        %1310 = vmatpush1.msra.mxu0 0.0
        %1311 = vmatprep.subr.mxu0 0.0
        %1312 = vmatpush1.msra.mxu0 0.0
        %1313 = vmatprep.subr.mxu0 0.0
        %1314 = vmatpush1.msra.mxu0 0.0
        %1315 = vmatprep.subr.mxu0 0.0
        %1316 = vmatpush1.msra.mxu0 0.0
        %1317 = vmatprep.subr.mxu0 0.0
        %1318 = vmatpush1.msra.mxu0 0.0
        %1319 = vmatprep.subr.mxu0 0.0
        %1320 = vmatpush1.msra.mxu0 0.0
        %1321 = vmatprep.subr.mxu0 0.0
        %1322 = vmatpush1.msra.mxu0 0.0
        %1323 = vmatprep.subr.mxu0 0.0
        %1324 = vmatpush1.msra.mxu0 0.0
        %1325 = vmatprep.subr.mxu0 0.0
        %1326 = vmatpush1.msra.mxu0 0.0
        %1327 = vmatprep.subr.mxu0 0.0
        %1328 = vmatpush1.msra.mxu0 0.0
        %1329 = vmatprep.subr.mxu0 0.0
        %1330 = vmatpush1.msra.mxu0 0.0
        %1331 = vmatprep.subr.mxu0 0.0
        %1332 = vmatpush1.msra.mxu0 0.0
        %1333 = vmatprep.subr.mxu0 0.0
        %1334 = vmatpush1.msra.mxu0 0.0
        %1335 = vmatprep.subr.mxu0 0.0
        %1336 = vmatpush1.msra.mxu0 0.0
        %1337 = vmatprep.subr.mxu0 0.0
        %1338 = vmatpush1.msra.mxu0 0.0
        %1339 = vmatprep.subr.mxu0 0.0
        %1340 = vmatpush1.msra.mxu0 0.0
        %1341 = vmatprep.subr.mxu0 0.0
        %1342 = vmatpush1.msra.mxu0 0.0
        %1343 = vmatprep.subr.mxu0 0.0
        %1344 = vmatpush1.msra.mxu0 0.0
        %1345 = vmatprep.subr.mxu0 0.0
        %1346 = vmatpush1.msra.mxu0 0.0
        %1347 = vmatprep.subr.mxu0 0.0
        %1348 = vmatpush1.msra.mxu0 0.0
        %1349 = vmatprep.subr.mxu0 0.0
        %1350 = vmatpush1.msra.mxu0 0.0
        %1351 = vmatprep.subr.mxu0 0.0
        %1352 = vmatpush1.msra.mxu0 0.0
        %1353 = vmatprep.subr.mxu0 0.0
        %1354 = vmatpush1.msra.mxu0 0.0
        %1355 = vmatprep.subr.mxu0 0.0
        %1356 = vmatpush1.msra.mxu0 0.0
        %1357 = vmatprep.subr.mxu0 0.0
        %1358 = vmatpush1.msra.mxu0 0.0
        %1359 = vmatprep.mubr.f32.mxu0 0.0
        %1360 = vmatmul.mubr.f32.gmra.mrb[0].mxu0 %v1293
        %v1361 = vpop.f32.mrb[0].mxu0
        %v1362 = vadd.f32 %v1287, %v1361
        %v1363 = vpop.f32.mrb[0].mxu0
        %1364 = vdwg.mxu0
        %v1365 = vadd.f32 %v1362, %v787
        %v1366 = vxor.u32 %v1365, 2147483648
        %v1367 = vmul.f32 %v1366, 1.442695
        %v1368 = vpow.pop %v1367
        %v1369 = vadd.f32 %v1368, 1.0
        %v1370 = vrcp.pop %v1369
        %v1371 = vmul.f32 1.0, %v1370
        %v1372 = vtanh.pop %v1365
        %v1373 = vmul.f32 %v1371, %v1096
        %1375 = vrot.lane.b32.xlu0 %v1372, 32
        %v1376 = vpop.permute.xlu0 %1375
        %v1378 = vmul.f32 %v1371, %v1376
        %1380 = vrot.lane.b32.xlu0 %v1378, 32
        %v1381 = vpop.permute.xlu0 %1380
        %v1383 = vadd.f32 %v1373, %v1381
        %v1384 = vtanh.pop %v1383
        %1386 = vrot.lane.b32.xlu0 %v1384, 32
        %v1387 = vpop.permute.xlu0 %1386
        %v1389 = vmul.f32 %v1371, %v1387
        %s1390 = sadd.s32 %s526, 2
        %v1391 = vstv %s1390
        %vm1392 = vcmp.lt.s32.totalorder %v1391, %v525
        %v1393 = vsel %vm1392, 1, 0
        %1394 = vset.pattern.permute.xlu0 0
        %1395 = vperm.xlu0 %1394, %v1393
        %v1396 = vpop.permute.xlu0 %1395
        %vm1397 = vcmp.eq.s32.totalorder %v1396, 1
        %v1398 = vsel %vm1397, %v1389, 0.0
        %1400 = vrot.lane.b32.xlu0 %v1398, 64
        %v1401 = vpop.permute.xlu0 %1400
        %s1403 = scalar_lea.vmem [#allocation6], 16
        %1404 = vst.msk [vmem:[%s1403] sm:$0xff] %vm532, %v1401
        %1406 = vst.msk [vmem:[#allocation2] sm:$0xff] %vm532, %v1292
        %1408 = vrot.lane.b32.xlu0 %v1208, 96
        %v1409 = vpop.permute.xlu0 %1408
        %1411 = vst.msk [vmem:[#allocation3] sm:$0xff] %vm532, %v1409
        %1413 = vrot.lane.b32.xlu0 %v1389, 64
        %v1414 = vpop.permute.xlu0 %1413
        %1416 = vst.msk [vmem:[#allocation4] sm:$0xff] %vm532, %v1414
        %1418 = vrot.lane.b32.xlu0 %v1383, 96
        %v1419 = vpop.permute.xlu0 %1418
        %1421 = vst.msk [vmem:[#allocation5] sm:$0xff] %vm532, %v1419
        %v1422 = vld [vmem:[#allocation6] sm:$0xff]
        %v1423 = vld [vmem:[#allocation6 + $0x8] sm:$0xff]
        %v1424 = vld [vmem:[#allocation6 + $0x10] sm:$0xff]
        %v1425 = vld [vmem:[#allocation18] sm:$0xff]
        %v1426 = vld [vmem:[#allocation18 + $0x8] sm:$0xff]
        %v1427 = vld [vmem:[#allocation18 + $0x10] sm:$0xff]
        %v1428 = vld [vmem:[#allocation18 + $0x18] sm:$0xff]
        %v1429 = vld [vmem:[#allocation19] sm:$0x1]
        %v1431 = vlaneseq
        %v1432 = vshrl.u32 %v1431, 7
        %v1433 = vsub.s32 0, %v1432
        %v1434 = vrot.slane %v1429, %v1433
        %v1437 = vsel %vm532, %v1422, 0
        %v1440 = vsel %vm532, %v1423, 0
        %v1443 = vsel %vm532, %v1424, 0
        %1445 = vmatprep.subr.mxu0 0.0
        %1446 = vmatpush1.msra.mxu0 %v1425
        %1447 = vmatprep.subr.mxu0 0.0
        %1448 = vmatpush1.msra.mxu0 %v1426
        %1449 = vmatprep.subr.mxu0 0.0
        %1450 = vmatpush1.msra.mxu0 %v1427
        %1451 = vmatprep.subr.mxu0 0.0
        %1452 = vmatpush1.msra.mxu0 %v1428
        %1453 = vmatprep.subr.mxu0 0.0
        %1454 = vmatpush1.msra.mxu0 0.0
        %1455 = vmatprep.subr.mxu0 0.0
        %1456 = vmatpush1.msra.mxu0 0.0
        %1457 = vmatprep.subr.mxu0 0.0
        %1458 = vmatpush1.msra.mxu0 0.0
        %1459 = vmatprep.subr.mxu0 0.0
        %1460 = vmatpush1.msra.mxu0 0.0
        %1461 = vmatprep.subr.mxu0 0.0
        %1462 = vmatpush1.msra.mxu0 0.0
        %1463 = vmatprep.subr.mxu0 0.0
        %1464 = vmatpush1.msra.mxu0 0.0
        %1465 = vmatprep.subr.mxu0 0.0
        %1466 = vmatpush1.msra.mxu0 0.0
        %1467 = vmatprep.subr.mxu0 0.0
        %1468 = vmatpush1.msra.mxu0 0.0
        %1469 = vmatprep.subr.mxu0 0.0
        %1470 = vmatpush1.msra.mxu0 0.0
        %1471 = vmatprep.subr.mxu0 0.0
        %1472 = vmatpush1.msra.mxu0 0.0
        %1473 = vmatprep.subr.mxu0 0.0
        %1474 = vmatpush1.msra.mxu0 0.0
        %1475 = vmatprep.subr.mxu0 0.0
        %1476 = vmatpush1.msra.mxu0 0.0
        %1477 = vmatprep.subr.mxu0 0.0
        %1478 = vmatpush1.msra.mxu0 0.0
        %1479 = vmatprep.subr.mxu0 0.0
        %1480 = vmatpush1.msra.mxu0 0.0
        %1481 = vmatprep.subr.mxu0 0.0
        %1482 = vmatpush1.msra.mxu0 0.0
        %1483 = vmatprep.subr.mxu0 0.0
        %1484 = vmatpush1.msra.mxu0 0.0
        %1485 = vmatprep.subr.mxu0 0.0
        %1486 = vmatpush1.msra.mxu0 0.0
        %1487 = vmatprep.subr.mxu0 0.0
        %1488 = vmatpush1.msra.mxu0 0.0
        %1489 = vmatprep.subr.mxu0 0.0
        %1490 = vmatpush1.msra.mxu0 0.0
        %1491 = vmatprep.subr.mxu0 0.0
        %1492 = vmatpush1.msra.mxu0 0.0
        %1493 = vmatprep.subr.mxu0 0.0
        %1494 = vmatpush1.msra.mxu0 0.0
        %1495 = vmatprep.subr.mxu0 0.0
        %1496 = vmatpush1.msra.mxu0 0.0
        %1497 = vmatprep.subr.mxu0 0.0
        %1498 = vmatpush1.msra.mxu0 0.0
        %1499 = vmatprep.subr.mxu0 0.0
        %1500 = vmatpush1.msra.mxu0 0.0
        %1501 = vmatprep.subr.mxu0 0.0
        %1502 = vmatpush1.msra.mxu0 0.0
        %1503 = vmatprep.subr.mxu0 0.0
        %1504 = vmatpush1.msra.mxu0 0.0
        %1505 = vmatprep.subr.mxu0 0.0
        %1506 = vmatpush1.msra.mxu0 0.0
        %1507 = vmatprep.subr.mxu0 0.0
        %1508 = vmatpush1.msra.mxu0 0.0
        %1509 = vmatprep.mubr.f32.mxu0 0.0
        %1510 = vmatmul.mubr.f32.gmra.mrb[0].mxu0 %v1437
        %v1511 = vpop.f32.mrb[0].mxu0
        %v1512 = vadd.f32 %v1434, %v1511
        %v1513 = vpop.f32.mrb[0].mxu0
        %1514 = vmatprep.mubr.f32.mxu0 0.0
        %1515 = vmatmul.mubr.f32.gmra.mrb[0].mxu0 %v1440
        %v1516 = vpop.f32.mrb[0].mxu0
        %v1517 = vadd.f32 %v1434, %v1516
        %v1518 = vpop.f32.mrb[0].mxu0
        %1519 = vmatprep.mubr.f32.mxu0 0.0
        %1520 = vmatmul.mubr.f32.gmra.mrb[0].mxu0 %v1443
        %v1521 = vpop.f32.mrb[0].mxu0
        %v1522 = vadd.f32 %v1434, %v1521
        %v1523 = vpop.f32.mrb[0].mxu0
        %1524 = vdwg.mxu0
        %v1525 = vmax.f32 %v1512, 0.0
        %v1526 = vmax.f32 %v1517, 0.0
        %v1527 = vmax.f32 %v1522, 0.0
        %v1528 = vld [vmem:[#allocation21] sm:$0xff]
        %v1529 = vld [vmem:[#allocation21 + $0x8] sm:$0xff]
        %v1530 = vld [vmem:[#allocation21 + $0x10] sm:$0xff]
        %v1531 = vld [vmem:[#allocation21 + $0x18] sm:$0xff]
        %v1532 = vld [vmem:[#allocation22] sm:$0x1]
        %v1534 = vlaneseq
        %v1535 = vshrl.u32 %v1534, 7
        %v1536 = vsub.s32 0, %v1535
        %v1537 = vrot.slane %v1532, %v1536
        %v1540 = vsel %vm532, %v1525, 0
        %v1543 = vsel %vm532, %v1526, 0
        %v1546 = vsel %vm532, %v1527, 0
        %1548 = vmatprep.subr.mxu0 0.0
        %1549 = vmatpush1.msra.mxu0 %v1528
        %1550 = vmatprep.subr.mxu0 0.0
        %1551 = vmatpush1.msra.mxu0 %v1529
        %1552 = vmatprep.subr.mxu0 0.0
        %1553 = vmatpush1.msra.mxu0 %v1530
        %1554 = vmatprep.subr.mxu0 0.0
        %1555 = vmatpush1.msra.mxu0 %v1531
        %1556 = vmatprep.subr.mxu0 0.0
        %1557 = vmatpush1.msra.mxu0 0.0
        %1558 = vmatprep.subr.mxu0 0.0
        %1559 = vmatpush1.msra.mxu0 0.0
        %1560 = vmatprep.subr.mxu0 0.0
        %1561 = vmatpush1.msra.mxu0 0.0
        %1562 = vmatprep.subr.mxu0 0.0
        %1563 = vmatpush1.msra.mxu0 0.0
        %1564 = vmatprep.subr.mxu0 0.0
        %1565 = vmatpush1.msra.mxu0 0.0
        %1566 = vmatprep.subr.mxu0 0.0
        %1567 = vmatpush1.msra.mxu0 0.0
        %1568 = vmatprep.subr.mxu0 0.0
        %1569 = vmatpush1.msra.mxu0 0.0
        %1570 = vmatprep.subr.mxu0 0.0
        %1571 = vmatpush1.msra.mxu0 0.0
        %1572 = vmatprep.subr.mxu0 0.0
        %1573 = vmatpush1.msra.mxu0 0.0
        %1574 = vmatprep.subr.mxu0 0.0
        %1575 = vmatpush1.msra.mxu0 0.0
        %1576 = vmatprep.subr.mxu0 0.0
        %1577 = vmatpush1.msra.mxu0 0.0
        %1578 = vmatprep.subr.mxu0 0.0
        %1579 = vmatpush1.msra.mxu0 0.0
        %1580 = vmatprep.subr.mxu0 0.0
        %1581 = vmatpush1.msra.mxu0 0.0
        %1582 = vmatprep.subr.mxu0 0.0
        %1583 = vmatpush1.msra.mxu0 0.0
        %1584 = vmatprep.subr.mxu0 0.0
        %1585 = vmatpush1.msra.mxu0 0.0
        %1586 = vmatprep.subr.mxu0 0.0
        %1587 = vmatpush1.msra.mxu0 0.0
        %1588 = vmatprep.subr.mxu0 0.0
        %1589 = vmatpush1.msra.mxu0 0.0
        %1590 = vmatprep.subr.mxu0 0.0
        %1591 = vmatpush1.msra.mxu0 0.0
        %1592 = vmatprep.subr.mxu0 0.0
        %1593 = vmatpush1.msra.mxu0 0.0
        %1594 = vmatprep.subr.mxu0 0.0
        %1595 = vmatpush1.msra.mxu0 0.0
        %1596 = vmatprep.subr.mxu0 0.0
        %1597 = vmatpush1.msra.mxu0 0.0
        %1598 = vmatprep.subr.mxu0 0.0
        %1599 = vmatpush1.msra.mxu0 0.0
        %1600 = vmatprep.subr.mxu0 0.0
        %1601 = vmatpush1.msra.mxu0 0.0
        %1602 = vmatprep.subr.mxu0 0.0
        %1603 = vmatpush1.msra.mxu0 0.0
        %1604 = vmatprep.subr.mxu0 0.0
        %1605 = vmatpush1.msra.mxu0 0.0
        %1606 = vmatprep.subr.mxu0 0.0
        %1607 = vmatpush1.msra.mxu0 0.0
        %1608 = vmatprep.subr.mxu0 0.0
        %1609 = vmatpush1.msra.mxu0 0.0
        %1610 = vmatprep.subr.mxu0 0.0
        %1611 = vmatpush1.msra.mxu0 0.0
        %1612 = vmatprep.mubr.f32.mxu0 0.0
        %1613 = vmatmul.mubr.f32.gmra.mrb[0].mxu0 %v1540
        %v1614 = vpop.f32.mrb[0].mxu0
        %v1615 = vadd.f32 %v1537, %v1614
        %v1616 = vpop.f32.mrb[0].mxu0
        %1617 = vmatprep.mubr.f32.mxu0 0.0
        %1618 = vmatmul.mubr.f32.gmra.mrb[0].mxu0 %v1543
        %v1619 = vpop.f32.mrb[0].mxu0
        %v1620 = vadd.f32 %v1537, %v1619
        %v1621 = vpop.f32.mrb[0].mxu0
        %1622 = vmatprep.mubr.f32.mxu0 0.0
        %1623 = vmatmul.mubr.f32.gmra.mrb[0].mxu0 %v1546
        %v1624 = vpop.f32.mrb[0].mxu0
        %v1625 = vadd.f32 %v1537, %v1624
        %v1626 = vpop.f32.mrb[0].mxu0
        %1627 = vdwg.mxu0
        %vm1628 = vcmask 130048
        %1629 = vst.msk [vmem:[%s500] sm:$0xff] %vm1628, %v1615
        %1630 = vst.msk [vmem:[%s500 + $0x8] sm:$0xff] %vm1628, %v1620
        %1631 = vst.msk [vmem:[%s500 + $0x10] sm:$0xff] %vm1628, %v1625
        %s1632 = sand.u32 %s255, 1
        %s1633 = scalar_lea.sflag [#allocation9], %s1632
        %s1634 = sand.u32 %s255, 1
        %s1635 = smul.addr %s1634, 24
        %s1636 = scalar_lea.vmem [#allocation24], %s1635
        // Predicated region
        $region105: #{encoder_forward.1} parent=59 // pred_check
          %p1637 = pneg %p265
        $region106: #{encoder_forward.1} parent=59 // pred_check_branch
          %1639 = sbr.rel (%p1637) target = $region108
        $region107: #{encoder_forward.1} parent=59 // pred_region
          %s1640 = smul.u32 3, %s32
          %s1642 = ssub.s32 384, 384
          %1643 = vsyncadd %s1633, %s1642
          %s1644 = smul.addr %s1640, 128
          %s1645 = scalar_lea.hbm %s10, %s1644
          %s1646 = sshll.u32 %s1636, 4
          %s1647 = int_to_ptr.vmem [resolvable:$true] %s1646
          %1652 = dma.vmem_to_hbm [thread:$0]  %s1647, 384, %s1645, %s1633, 128, 128, 8
        $region108: #{encoder_forward.1} parent=59 // pred_fallthru
          _
      $region60: #{encoder_forward.1} parent=5 // pred_fallthru
        _
      %p1653 = scmp.le.s32.totalorder 2, %s27
      // Predicated region
      $region109: #{encoder_forward.1} parent=5 // pred_check
        %p1654 = pneg %p1653
      $region110: #{encoder_forward.1} parent=5 // pred_check_branch
        %1656 = sbr.rel (%p1654) target = $region112
      $region111: #{encoder_forward.1} parent=5 // pred_region
        %s1657 = ssub.s32 %s27, 2
        // Predicated region
        $region113: #{encoder_forward.1} parent=111 // pred_check
          %p1658 = pneg %p271
        $region114: #{encoder_forward.1} parent=111 // pred_check_branch
          %1660 = sbr.rel (%p1658) target = $region116
        $region115: #{encoder_forward.1} parent=111 // pred_region
          %s1661 = sand.u32 %s256, 1
          %s1662 = scalar_lea.sflag [#allocation9], %s1661
          %s1663 = sand.u32 %s256, 1
          %s1664 = smul.addr %s1663, 24
          %s1665 = scalar_lea.vmem [#allocation24], %s1664
          %1666 = dma.done %s1662, 384
        $region116: #{encoder_forward.1} parent=111 // pred_fallthru
          _
      $region112: #{encoder_forward.1} parent=5 // pred_fallthru
        _
    $region6: #{encoder_forward.1} parent=1 // loop_footer
      %s31 = sadd.s32 1, %s27
    $region7: #{encoder_forward.1} parent=1 // loop_footer_branch
      %26 = sbr.rel target = $region3
    $region8: #{encoder_forward.1} parent=1 // loop_exit
      _
    %1667 = vsyncpa [#allocation8], 1
    %s1668 = scalar_lea.sflag [#allocation8], 1
    %1669 = vsyncpa %s1668, 1
    %1670 = vsyncpa [#allocation11], 1
    %1671 = vsyncpa [#allocation14], 1
    %1672 = vsyncpa [#allocation17], 1
    %1673 = vsyncpa [#allocation20], 1
    %1674 = vsyncpa [#allocation23], 1
    %1675 = vsyncpa [#allocation9], 1
    %s1676 = scalar_lea.sflag [#allocation9], 1
    %1677 = vsyncpa %s1676, 1

</llo_original>
